<compile_context>
chip_gen: v5e
topology: v5e:2x2
jax: 0.10.0
libtpu: 0.0.40
codegen_flags: <defaults>
</compile_context>

<pallas_src>
import functools

import jax
import jax.numpy as jnp
from jax.experimental import pallas as pl
from jax.experimental.pallas import tpu as pltpu


# ----------------------------------------------------------------------------
# Single fused kernel
# ----------------------------------------------------------------------------
def fused_lstm_classifier_kernel(
    ids_ref,      # (Tmax*NB, 1) int32  time-major joint token ids (label ids +Vp, pads = -1)
    len_ref,      # (NB, 1)      int32  joint sequence lengths [lengths ; label_seq_input]
    emb_ref,      # (Vp, E)      f32    embedding table (vocab rows padded to x8)
    wih_ref,      # (2E, 4H)     f32    [Wih_sentence ; Wih_label]
    whh_ref,      # (2H, 4H)     f32    [Whh_sentence ; Whh_label]
    bgate_ref,    # (NB, 4H)     f32    per-row gate bias (b_ih + b_hh of matching LSTM)
    wlin_ref,     # (2H, H)      f32    [W_lin1^T ; W_lin2^T]
    blin_ref,     # (NB, H)      f32    per-row linear bias
    out_ref,      # (B, L)       f32    cosine scores
):
    f32 = jnp.float32
    B, L = out_ref.shape
    NB = len_ref.shape[0]
    Tmax = ids_ref.shape[0] // NB
    Vp, E = emb_ref.shape
    H = wlin_ref.shape[1]

    emb = emb_ref[...]
    wih = wih_ref[...]

    # Embedding gather fused with the input projection for BOTH branches, one MXU
    # pass over all timesteps:
    #   emb2gates[v]      = emb[v] @ Wih_sentence   (sentence rows select cols [0, Vp))
    #   emb2gates[Vp + v] = emb[v] @ Wih_label      (label ids were offset by Vp in wrapper)
    emb2gates = jnp.concatenate(
        [jnp.dot(emb, wih[0:E, :], preferred_element_type=f32),
         jnp.dot(emb, wih[E:2 * E, :], preferred_element_type=f32)], axis=0)    # (2Vp, 4H)
    # TODO(synk): one-hot gather keeps MXU flops / VMEM O(V); switch to a scalar-prefetch
    # or DMA row gather before the vocabulary grows (VMEM wall hits ~2x sooner on v7x).
    ids = ids_ref[...]                                                          # (Tmax*NB, 1)
    onehot = (ids == jax.lax.broadcasted_iota(
        jnp.int32, (ids.shape[0], 2 * Vp), 1)).astype(f32)                      # pads(-1) -> zero rows
    gates_x = jnp.dot(onehot, emb2gates, preferred_element_type=f32)            # (Tmax*NB, 4H)

    whh = whh_ref[...]            # (2H, 4H)
    bgate = bgate_ref[...]        # (NB, 4H)   hoisted; added once per step
    last_t = len_ref[...] - 1     # (NB, 1)

    # Mask placing h of sentence rows (0:B) in lanes [0,H) and label rows (B:NB) in [H,2H).
    row = jax.lax.broadcasted_iota(jnp.int32, (NB, 2 * H), 0)
    col = jax.lax.broadcasted_iota(jnp.int32, (NB, 2 * H), 1)
    mask2h = ((row < B) == (col < H)).astype(f32)

    h2 = jnp.zeros((NB, 2 * H), f32)          # masked joint hidden state
    c = jnp.zeros((NB, H), f32)
    h_last2 = jnp.zeros((NB, 2 * H), f32)

    # Joint recurrence: ONE matmul + ONE sigmoid/tanh pass per step, max(T,Tl) steps
    # (was T+Tl steps with 2x MXU/EUP each).  Fully unrolled: Tmax is tiny; switch to
    # lax.fori_loop(unroll=k) if it grows past a few dozen (vreg pressure).
    for t in range(Tmax):
        g = gates_x[t * NB:(t + 1) * NB, :] + bgate + jnp.dot(
            h2, whh, preferred_element_type=f32)                                # (NB, 4H)
        sig = jax.nn.sigmoid(g)      # full-tile EUP pass; gate order [i, f, g, o]
        tnh = jnp.tanh(g)            # full-tile EUP pass
        c = sig[:, H:2 * H] * c + sig[:, 0:H] * tnh[:, 2 * H:3 * H]
        h = sig[:, 3 * H:4 * H] * jnp.tanh(c)                                   # (NB, H)
        h2 = jnp.concatenate([h, h], axis=1) * mask2h                           # re-place per row group
        h_last2 = jnp.where(last_t == t, h2, h_last2)                           # keep only last valid h

    # TODO(synk): nn.Dropout(0.5) treated as eval-mode identity (inference semantics).
    # Both linear projections in a single matmul via the same masked 2H layout.
    uv = jnp.dot(h_last2, wlin_ref[...], preferred_element_type=f32) + blin_ref[...]   # (NB, H)
    u = uv[0:B, :]
    v = uv[B:NB, :]

    eps = jnp.float32(1e-8)
    inv_u = jax.lax.rsqrt(jnp.maximum(jnp.sum(u * u, axis=-1, keepdims=True), eps * eps))
    inv_v = jax.lax.rsqrt(jnp.maximum(jnp.sum(v * v, axis=-1, keepdims=True), eps * eps))
    # cos[i, j] = (u_i/||u_i||) . (v_j/||v_j||); contract H on both sides, no transpose.
    out_ref[...] = jax.lax.dot_general(
        u * inv_u, v * inv_v, (((1,), (1,)), ((), ())), preferred_element_type=f32)


def _full_spec(shape):
    n = len(shape)
    return pl.BlockSpec(shape, lambda i, _n=n: (0,) * _n)


# ----------------------------------------------------------------------------
# One-time parameter packing into the fused joint layout (layout plumbing only)
# ----------------------------------------------------------------------------
def pack_params(params, batch_size, label_size):
    H = params["lstm_whh_t"].shape[0]
    B, L = batch_size, label_size

    emb = params["embedding"].astype(jnp.float32)
    V = emb.shape[0]
    Vp = ((V + 7) // 8) * 8          # pad vocab rows to x8 sublanes; padded rows never selected
    if Vp != V:
        emb = jnp.pad(emb, ((0, Vp - V), (0, 0)))

    return {
        "emb": emb,                                                                        # (Vp, E)
        "wih": jnp.concatenate([params["lstm_wih_t"], params["lstm1_wih_t"]], axis=0),     # (2E, 4H)
        "whh": jnp.concatenate([params["lstm_whh_t"], params["lstm1_whh_t"]], axis=0),     # (2H, 4H)
        "bgate": jnp.concatenate([jnp.broadcast_to(params["lstm_b"], (B, 4 * H)),
                                  jnp.broadcast_to(params["lstm1_b"], (L, 4 * H))], axis=0),  # (NB, 4H)
        "wlin": jnp.concatenate([params["lin1_w_t"], params["lin2_w_t"]], axis=0),         # (2H, H)
        "blin": jnp.concatenate([jnp.broadcast_to(params["lin1_b"], (B, H)),
                                 jnp.broadcast_to(params["lin2_b"], (L, H))], axis=0),     # (NB, H)
    }


# ----------------------------------------------------------------------------
# Forward pass wrapper (single pallas_call)
# ----------------------------------------------------------------------------
def lstm_classifier_forward(packed, sentence, lengths, label_input, label_seq_input):
    B, T = sentence.shape
    L, Tl = label_input.shape
    NB = B + L
    Tmax = max(T, Tl)
    Vp = packed["emb"].shape[0]

    # Joint time-major token ids: step t occupies rows [t*NB, (t+1)*NB): first the B
    # sentence rows, then the L label rows.  Label ids are offset by Vp so a single
    # one-hot matmul picks the correct Wih per row group; pads (-1) give zero gates.
    sent_ids = sentence.astype(jnp.int32)
    lab_ids = label_input.astype(jnp.int32) + Vp
    if Tmax > T:
        sent_ids = jnp.pad(sent_ids, ((0, 0), (0, Tmax - T)), constant_values=-1)
    if Tmax > Tl:
        lab_ids = jnp.pad(lab_ids, ((0, 0), (0, Tmax - Tl)), constant_values=-1)
    ids_joint = jnp.transpose(jnp.concatenate([sent_ids, lab_ids], axis=0), (1, 0))
    ids_joint = ids_joint.reshape(Tmax * NB, 1)

    len_joint = jnp.concatenate(
        [lengths.reshape(-1), label_seq_input.reshape(-1)]).astype(jnp.int32).reshape(NB, 1)

    args = (ids_joint, len_joint, packed["emb"], packed["wih"], packed["whh"],
            packed["bgate"], packed["wlin"], packed["blin"])

    return pl.pallas_call(
        fused_lstm_classifier_kernel,
        out_shape=jax.ShapeDtypeStruct((B, L), jnp.float32),
        grid=(1,),
        in_specs=[_full_spec(a.shape) for a in args],
        out_specs=_full_spec((B, L)),
        compiler_params=pltpu.CompilerParams(dimension_semantics=("arbitrary",)),
    )(*args)


# ----------------------------------------------------------------------------
# Parameter init (independent keys; LSTM weights stored transposed; bias = b_ih+b_hh)
# ----------------------------------------------------------------------------
def init_params(key, vocab_size, embedding_dim, hidden_dim):
    keys = jax.random.split(key, 13)
    s = 1.0 / jnp.sqrt(hidden_dim)

    def u(k, shape):
        return jax.random.uniform(k, shape, jnp.float32, -s, s)

    return {
        "embedding":   jax.random.normal(keys[0], (vocab_size, embedding_dim), jnp.float32),
        # LSTM weights transposed: (in, 4H) / (H, 4H); gate order [i, f, g, o].
        "lstm_wih_t":  u(keys[1], (embedding_dim, 4 * hidden_dim)),
        "lstm_whh_t":  u(keys[2], (hidden_dim, 4 * hidden_dim)),
        "lstm_b":      u(keys[3], (1, 4 * hidden_dim)) + u(keys[4], (1, 4 * hidden_dim)),
        "lstm1_wih_t": u(keys[5], (embedding_dim, 4 * hidden_dim)),
        "lstm1_whh_t": u(keys[6], (hidden_dim, 4 * hidden_dim)),
        "lstm1_b":     u(keys[7], (1, 4 * hidden_dim)) + u(keys[8], (1, 4 * hidden_dim)),
        # Linear layers transposed: y = x @ W^T + b  ->  store W^T as (H, H).
        "lin1_w_t":    u(keys[9], (hidden_dim, hidden_dim)),
        "lin1_b":      u(keys[10], (1, hidden_dim)),
        "lin2_w_t":    u(keys[11], (hidden_dim, hidden_dim)),
        "lin2_b":      u(keys[12], (1, hidden_dim)),
    }


if __name__ == "__main__":
    vocab_size = 50
    embedding_dim = 16
    hidden_dim = 32
    batch_size = 8          # B
    label_size = 8          # L
    seq_len = 8             # T
    label_seq_len = 4       # Tl

    key = jax.random.PRNGKey(0)
    kp, ks, kl = jax.random.split(key, 3)

    params = init_params(kp, vocab_size, embedding_dim, hidden_dim)
    packed = pack_params(params, batch_size, label_size)   # one-time packing, outside jit

    sentence = jax.random.randint(ks, (batch_size, seq_len), 0, vocab_size, jnp.int32)
    # lengths sorted descending (pack_padded_sequence convention), all >= 1
    lengths = jnp.array([8, 8, 7, 6, 5, 4, 3, 2], dtype=jnp.int32)

    label_input = jax.random.randint(kl, (label_size, label_seq_len), 0, vocab_size, jnp.int32)
    label_seq_input = jnp.array([4, 4, 3, 3, 2, 2, 1, 1], dtype=jnp.int32)

    fwd = jax.jit(functools.partial(lstm_classifier_forward, packed))
    score = fwd(sentence, lengths, label_input, label_seq_input)
    jax.block_until_ready(score)

    assert score.shape == (batch_size, label_size)
    assert bool(jnp.all(jnp.isfinite(score)))
    assert bool(jnp.all(jnp.abs(score) <= 1.0 + 1e-5))   # cosine range sanity check
    print("KERNEL_OK")
</pallas_src>

<mosaic_0001>
module attributes {stable_mosaic.version = 11 : i64} {
  func.func @fused_lstm_classifier_kernel(%arg0: i32, %arg1: memref<128x1xi32, #tpu.memory_space<vmem>>, %arg2: memref<16x1xi32, #tpu.memory_space<vmem>>, %arg3: memref<56x16xf32, #tpu.memory_space<vmem>>, %arg4: memref<32x128xf32, #tpu.memory_space<vmem>>, %arg5: memref<64x128xf32, #tpu.memory_space<vmem>>, %arg6: memref<16x128xf32, #tpu.memory_space<vmem>>, %arg7: memref<64x32xf32, #tpu.memory_space<vmem>>, %arg8: memref<16x32xf32, #tpu.memory_space<vmem>>, %arg9: memref<8x8xf32, #tpu.memory_space<vmem>>) attributes {dimension_semantics = [#tpu.dimension_semantics<arbitrary>], iteration_bounds = array<i64: 1>, scalar_prefetch = 0 : i64, scratch_operands = 0 : i64, tpu.core_type = #tpu.core_type<tc>, window_params = [{pipeline_mode = #tpu.pipeline_mode<synchronous>, transform_indices = @transform_0, window_bounds = array<i64: 128, 1>}, {pipeline_mode = #tpu.pipeline_mode<synchronous>, transform_indices = @transform_1, window_bounds = array<i64: 16, 1>}, {pipeline_mode = #tpu.pipeline_mode<synchronous>, transform_indices = @transform_2, window_bounds = array<i64: 56, 16>}, {pipeline_mode = #tpu.pipeline_mode<synchronous>, transform_indices = @transform_3, window_bounds = array<i64: 32, 128>}, {pipeline_mode = #tpu.pipeline_mode<synchronous>, transform_indices = @transform_4, window_bounds = array<i64: 64, 128>}, {pipeline_mode = #tpu.pipeline_mode<synchronous>, transform_indices = @transform_5, window_bounds = array<i64: 16, 128>}, {pipeline_mode = #tpu.pipeline_mode<synchronous>, transform_indices = @transform_6, window_bounds = array<i64: 64, 32>}, {pipeline_mode = #tpu.pipeline_mode<synchronous>, transform_indices = @transform_7, window_bounds = array<i64: 16, 32>}, {pipeline_mode = #tpu.pipeline_mode<synchronous>, transform_indices = @transform_8, window_bounds = array<i64: 8, 8>}]} {
    %c0 = arith.constant 0 : index
    %c0_0 = arith.constant 0 : index
    %0 = vector.load %arg3[%c0, %c0_0] : memref<56x16xf32, #tpu.memory_space<vmem>>, vector<56x16xf32>
    %c0_1 = arith.constant 0 : index
    %c0_2 = arith.constant 0 : index
    %1 = vector.load %arg4[%c0_1, %c0_2] : memref<32x128xf32, #tpu.memory_space<vmem>>, vector<32x128xf32>
    %2 = vector.extract_strided_slice %1 {offsets = [0, 0], sizes = [16, 128], strides = [1, 1]} : vector<32x128xf32> to vector<16x128xf32>
    %cst = arith.constant dense<0.000000e+00> : vector<56x128xf32>
    %3 = tpu.matmul %0, %2, %cst {dimension_numbers = #tpu.dot_dimension_numbers<[1], [0], [0], [1], [0, 0, 1, 1], [], []>} : vector<56x16xf32>, vector<16x128xf32>, vector<56x128xf32> -> vector<56x128xf32>
    %4 = vector.extract_strided_slice %1 {offsets = [16, 0], sizes = [16, 128], strides = [1, 1]} : vector<32x128xf32> to vector<16x128xf32>
    %cst_3 = arith.constant dense<0.000000e+00> : vector<56x128xf32>
    %5 = tpu.matmul %0, %4, %cst_3 {dimension_numbers = #tpu.dot_dimension_numbers<[1], [0], [0], [1], [0, 0, 1, 1], [], []>} : vector<56x16xf32>, vector<16x128xf32>, vector<56x128xf32> -> vector<56x128xf32>
    %6 = tpu.concatenate %3, %5 in 0 : vector<56x128xf32>, vector<56x128xf32> -> vector<112x128xf32>
    %c0_4 = arith.constant 0 : index
    %c0_5 = arith.constant 0 : index
    %7 = vector.load %arg1[%c0_4, %c0_5] : memref<128x1xi32, #tpu.memory_space<vmem>>, vector<128x1xi32>
    %8 = tpu.iota {dimensions = array<i32: 1>} : vector<128x112xi32>
    %9 = vector.broadcast %7 : vector<128x1xi32> to vector<128x112xi32>
    %10 = arith.cmpi eq, %9, %8 : vector<128x112xi32>
    %11 = arith.extui %10 : vector<128x112xi1> to vector<128x112xi32>
    %12 = arith.sitofp %11 : vector<128x112xi32> to vector<128x112xf32>
    %cst_6 = arith.constant dense<0.000000e+00> : vector<128x128xf32>
    %13 = tpu.matmul %12, %6, %cst_6 {dimension_numbers = #tpu.dot_dimension_numbers<[1], [0], [0], [1], [0, 0, 1, 1], [], []>} : vector<128x112xf32>, vector<112x128xf32>, vector<128x128xf32> -> vector<128x128xf32>
    %c0_7 = arith.constant 0 : index
    %c0_8 = arith.constant 0 : index
    %14 = vector.load %arg5[%c0_7, %c0_8] : memref<64x128xf32, #tpu.memory_space<vmem>>, vector<64x128xf32>
    %c0_9 = arith.constant 0 : index
    %c0_10 = arith.constant 0 : index
    %15 = vector.load %arg6[%c0_9, %c0_10] : memref<16x128xf32, #tpu.memory_space<vmem>>, vector<16x128xf32>
    %c0_11 = arith.constant 0 : index
    %c0_12 = arith.constant 0 : index
    %16 = vector.load %arg2[%c0_11, %c0_12] : memref<16x1xi32, #tpu.memory_space<vmem>>, vector<16x1xi32>
    %c1_i32 = arith.constant 1 : i32
    %17 = vector.broadcast %c1_i32 : i32 to vector<16x1xi32>
    %18 = arith.subi %16, %17 : vector<16x1xi32>
    %19 = tpu.iota {dimensions = array<i32: 0>} : vector<16x64xi32>
    %20 = tpu.iota {dimensions = array<i32: 1>} : vector<16x64xi32>
    %c8_i32 = arith.constant 8 : i32
    %21 = vector.broadcast %c8_i32 : i32 to vector<16x64xi32>
    %22 = arith.cmpi slt, %19, %21 : vector<16x64xi32>
    %c32_i32 = arith.constant 32 : i32
    %23 = vector.broadcast %c32_i32 : i32 to vector<16x64xi32>
    %24 = arith.cmpi slt, %20, %23 : vector<16x64xi32>
    %25 = arith.xori %22, %24 : vector<16x64xi1>
    %cst_13 = arith.constant dense<true> : vector<16x64xi1>
    %26 = arith.xori %25, %cst_13 : vector<16x64xi1>
    %27 = arith.extui %26 : vector<16x64xi1> to vector<16x64xi32>
    %28 = arith.sitofp %27 : vector<16x64xi32> to vector<16x64xf32>
    %cst_14 = arith.constant 0.000000e+00 : f32
    %29 = vector.broadcast %cst_14 : f32 to vector<16x64xf32>
    %cst_15 = arith.constant 0.000000e+00 : f32
    %30 = vector.broadcast %cst_15 : f32 to vector<16x32xf32>
    %cst_16 = arith.constant 0.000000e+00 : f32
    %31 = vector.broadcast %cst_16 : f32 to vector<16x64xf32>
    %32 = vector.extract_strided_slice %13 {offsets = [0, 0], sizes = [16, 128], strides = [1, 1]} : vector<128x128xf32> to vector<16x128xf32>
    %33 = arith.addf %32, %15 : vector<16x128xf32>
    %cst_17 = arith.constant dense<0.000000e+00> : vector<16x128xf32>
    %34 = tpu.matmul %29, %14, %cst_17 {dimension_numbers = #tpu.dot_dimension_numbers<[1], [0], [0], [1], [0, 0, 1, 1], [], []>} : vector<16x64xf32>, vector<64x128xf32>, vector<16x128xf32> -> vector<16x128xf32>
    %35 = arith.addf %33, %34 : vector<16x128xf32>
    %36 = arith.negf %35 : vector<16x128xf32>
    %37 = math.exp %36 : vector<16x128xf32>
    %cst_18 = arith.constant 1.000000e+00 : f32
    %38 = vector.broadcast %cst_18 : f32 to vector<16x128xf32>
    %39 = arith.addf %38, %37 : vector<16x128xf32>
    %40 = arith.divf %38, %39 : vector<16x128xf32>
    %41 = math.tanh %35 : vector<16x128xf32>
    %42 = vector.extract_strided_slice %40 {offsets = [0, 32], sizes = [16, 32], strides = [1, 1]} : vector<16x128xf32> to vector<16x32xf32>
    %43 = arith.mulf %42, %30 : vector<16x32xf32>
    %44 = vector.extract_strided_slice %40 {offsets = [0, 0], sizes = [16, 32], strides = [1, 1]} : vector<16x128xf32> to vector<16x32xf32>
    %45 = vector.extract_strided_slice %41 {offsets = [0, 64], sizes = [16, 32], strides = [1, 1]} : vector<16x128xf32> to vector<16x32xf32>
    %46 = arith.mulf %44, %45 : vector<16x32xf32>
    %47 = arith.addf %43, %46 : vector<16x32xf32>
    %48 = vector.extract_strided_slice %40 {offsets = [0, 96], sizes = [16, 32], strides = [1, 1]} : vector<16x128xf32> to vector<16x32xf32>
    %49 = math.tanh %47 : vector<16x32xf32>
    %50 = arith.mulf %48, %49 : vector<16x32xf32>
    %51 = tpu.concatenate %50, %50 in 1 : vector<16x32xf32>, vector<16x32xf32> -> vector<16x64xf32>
    %52 = arith.mulf %51, %28 : vector<16x64xf32>
    %c0_i32 = arith.constant 0 : i32
    %53 = vector.broadcast %c0_i32 : i32 to vector<16x1xi32>
    %54 = arith.cmpi eq, %18, %53 : vector<16x1xi32>
    %55 = vector.shape_cast %54 : vector<16x1xi1> to vector<16x1xi1>
    %56 = vector.broadcast %55 : vector<16x1xi1> to vector<16x64xi1>
    %57 = arith.select %56, %52, %31 : vector<16x64xi1>, vector<16x64xf32>
    %58 = vector.extract_strided_slice %13 {offsets = [16, 0], sizes = [16, 128], strides = [1, 1]} : vector<128x128xf32> to vector<16x128xf32>
    %59 = arith.addf %58, %15 : vector<16x128xf32>
    %cst_19 = arith.constant dense<0.000000e+00> : vector<16x128xf32>
    %60 = tpu.matmul %52, %14, %cst_19 {dimension_numbers = #tpu.dot_dimension_numbers<[1], [0], [0], [1], [0, 0, 1, 1], [], []>} : vector<16x64xf32>, vector<64x128xf32>, vector<16x128xf32> -> vector<16x128xf32>
    %61 = arith.addf %59, %60 : vector<16x128xf32>
    %62 = arith.negf %61 : vector<16x128xf32>
    %63 = math.exp %62 : vector<16x128xf32>
    %cst_20 = arith.constant 1.000000e+00 : f32
    %64 = vector.broadcast %cst_20 : f32 to vector<16x128xf32>
    %65 = arith.addf %64, %63 : vector<16x128xf32>
    %66 = arith.divf %64, %65 : vector<16x128xf32>
    %67 = math.tanh %61 : vector<16x128xf32>
    %68 = vector.extract_strided_slice %66 {offsets = [0, 32], sizes = [16, 32], strides = [1, 1]} : vector<16x128xf32> to vector<16x32xf32>
    %69 = arith.mulf %68, %47 : vector<16x32xf32>
    %70 = vector.extract_strided_slice %66 {offsets = [0, 0], sizes = [16, 32], strides = [1, 1]} : vector<16x128xf32> to vector<16x32xf32>
    %71 = vector.extract_strided_slice %67 {offsets = [0, 64], sizes = [16, 32], strides = [1, 1]} : vector<16x128xf32> to vector<16x32xf32>
    %72 = arith.mulf %70, %71 : vector<16x32xf32>
    %73 = arith.addf %69, %72 : vector<16x32xf32>
    %74 = vector.extract_strided_slice %66 {offsets = [0, 96], sizes = [16, 32], strides = [1, 1]} : vector<16x128xf32> to vector<16x32xf32>
    %75 = math.tanh %73 : vector<16x32xf32>
    %76 = arith.mulf %74, %75 : vector<16x32xf32>
    %77 = tpu.concatenate %76, %76 in 1 : vector<16x32xf32>, vector<16x32xf32> -> vector<16x64xf32>
    %78 = arith.mulf %77, %28 : vector<16x64xf32>
    %c1_i32_21 = arith.constant 1 : i32
    %79 = vector.broadcast %c1_i32_21 : i32 to vector<16x1xi32>
    %80 = arith.cmpi eq, %18, %79 : vector<16x1xi32>
    %81 = vector.shape_cast %80 : vector<16x1xi1> to vector<16x1xi1>
    %82 = vector.broadcast %81 : vector<16x1xi1> to vector<16x64xi1>
    %83 = arith.select %82, %78, %57 : vector<16x64xi1>, vector<16x64xf32>
    %84 = vector.extract_strided_slice %13 {offsets = [32, 0], sizes = [16, 128], strides = [1, 1]} : vector<128x128xf32> to vector<16x128xf32>
    %85 = arith.addf %84, %15 : vector<16x128xf32>
    %cst_22 = arith.constant dense<0.000000e+00> : vector<16x128xf32>
    %86 = tpu.matmul %78, %14, %cst_22 {dimension_numbers = #tpu.dot_dimension_numbers<[1], [0], [0], [1], [0, 0, 1, 1], [], []>} : vector<16x64xf32>, vector<64x128xf32>, vector<16x128xf32> -> vector<16x128xf32>
    %87 = arith.addf %85, %86 : vector<16x128xf32>
    %88 = arith.negf %87 : vector<16x128xf32>
    %89 = math.exp %88 : vector<16x128xf32>
    %cst_23 = arith.constant 1.000000e+00 : f32
    %90 = vector.broadcast %cst_23 : f32 to vector<16x128xf32>
    %91 = arith.addf %90, %89 : vector<16x128xf32>
    %92 = arith.divf %90, %91 : vector<16x128xf32>
    %93 = math.tanh %87 : vector<16x128xf32>
    %94 = vector.extract_strided_slice %92 {offsets = [0, 32], sizes = [16, 32], strides = [1, 1]} : vector<16x128xf32> to vector<16x32xf32>
    %95 = arith.mulf %94, %73 : vector<16x32xf32>
    %96 = vector.extract_strided_slice %92 {offsets = [0, 0], sizes = [16, 32], strides = [1, 1]} : vector<16x128xf32> to vector<16x32xf32>
    %97 = vector.extract_strided_slice %93 {offsets = [0, 64], sizes = [16, 32], strides = [1, 1]} : vector<16x128xf32> to vector<16x32xf32>
    %98 = arith.mulf %96, %97 : vector<16x32xf32>
    %99 = arith.addf %95, %98 : vector<16x32xf32>
    %100 = vector.extract_strided_slice %92 {offsets = [0, 96], sizes = [16, 32], strides = [1, 1]} : vector<16x128xf32> to vector<16x32xf32>
    %101 = math.tanh %99 : vector<16x32xf32>
    %102 = arith.mulf %100, %101 : vector<16x32xf32>
    %103 = tpu.concatenate %102, %102 in 1 : vector<16x32xf32>, vector<16x32xf32> -> vector<16x64xf32>
    %104 = arith.mulf %103, %28 : vector<16x64xf32>
    %c2_i32 = arith.constant 2 : i32
    %105 = vector.broadcast %c2_i32 : i32 to vector<16x1xi32>
    %106 = arith.cmpi eq, %18, %105 : vector<16x1xi32>
    %107 = vector.shape_cast %106 : vector<16x1xi1> to vector<16x1xi1>
    %108 = vector.broadcast %107 : vector<16x1xi1> to vector<16x64xi1>
    %109 = arith.select %108, %104, %83 : vector<16x64xi1>, vector<16x64xf32>
    %110 = vector.extract_strided_slice %13 {offsets = [48, 0], sizes = [16, 128], strides = [1, 1]} : vector<128x128xf32> to vector<16x128xf32>
    %111 = arith.addf %110, %15 : vector<16x128xf32>
    %cst_24 = arith.constant dense<0.000000e+00> : vector<16x128xf32>
    %112 = tpu.matmul %104, %14, %cst_24 {dimension_numbers = #tpu.dot_dimension_numbers<[1], [0], [0], [1], [0, 0, 1, 1], [], []>} : vector<16x64xf32>, vector<64x128xf32>, vector<16x128xf32> -> vector<16x128xf32>
    %113 = arith.addf %111, %112 : vector<16x128xf32>
    %114 = arith.negf %113 : vector<16x128xf32>
    %115 = math.exp %114 : vector<16x128xf32>
    %cst_25 = arith.constant 1.000000e+00 : f32
    %116 = vector.broadcast %cst_25 : f32 to vector<16x128xf32>
    %117 = arith.addf %116, %115 : vector<16x128xf32>
    %118 = arith.divf %116, %117 : vector<16x128xf32>
    %119 = math.tanh %113 : vector<16x128xf32>
    %120 = vector.extract_strided_slice %118 {offsets = [0, 32], sizes = [16, 32], strides = [1, 1]} : vector<16x128xf32> to vector<16x32xf32>
    %121 = arith.mulf %120, %99 : vector<16x32xf32>
    %122 = vector.extract_strided_slice %118 {offsets = [0, 0], sizes = [16, 32], strides = [1, 1]} : vector<16x128xf32> to vector<16x32xf32>
    %123 = vector.extract_strided_slice %119 {offsets = [0, 64], sizes = [16, 32], strides = [1, 1]} : vector<16x128xf32> to vector<16x32xf32>
    %124 = arith.mulf %122, %123 : vector<16x32xf32>
    %125 = arith.addf %121, %124 : vector<16x32xf32>
    %126 = vector.extract_strided_slice %118 {offsets = [0, 96], sizes = [16, 32], strides = [1, 1]} : vector<16x128xf32> to vector<16x32xf32>
    %127 = math.tanh %125 : vector<16x32xf32>
    %128 = arith.mulf %126, %127 : vector<16x32xf32>
    %129 = tpu.concatenate %128, %128 in 1 : vector<16x32xf32>, vector<16x32xf32> -> vector<16x64xf32>
    %130 = arith.mulf %129, %28 : vector<16x64xf32>
    %c3_i32 = arith.constant 3 : i32
    %131 = vector.broadcast %c3_i32 : i32 to vector<16x1xi32>
    %132 = arith.cmpi eq, %18, %131 : vector<16x1xi32>
    %133 = vector.shape_cast %132 : vector<16x1xi1> to vector<16x1xi1>
    %134 = vector.broadcast %133 : vector<16x1xi1> to vector<16x64xi1>
    %135 = arith.select %134, %130, %109 : vector<16x64xi1>, vector<16x64xf32>
    %136 = vector.extract_strided_slice %13 {offsets = [64, 0], sizes = [16, 128], strides = [1, 1]} : vector<128x128xf32> to vector<16x128xf32>
    %137 = arith.addf %136, %15 : vector<16x128xf32>
    %cst_26 = arith.constant dense<0.000000e+00> : vector<16x128xf32>
    %138 = tpu.matmul %130, %14, %cst_26 {dimension_numbers = #tpu.dot_dimension_numbers<[1], [0], [0], [1], [0, 0, 1, 1], [], []>} : vector<16x64xf32>, vector<64x128xf32>, vector<16x128xf32> -> vector<16x128xf32>
    %139 = arith.addf %137, %138 : vector<16x128xf32>
    %140 = arith.negf %139 : vector<16x128xf32>
    %141 = math.exp %140 : vector<16x128xf32>
    %cst_27 = arith.constant 1.000000e+00 : f32
    %142 = vector.broadcast %cst_27 : f32 to vector<16x128xf32>
    %143 = arith.addf %142, %141 : vector<16x128xf32>
    %144 = arith.divf %142, %143 : vector<16x128xf32>
    %145 = math.tanh %139 : vector<16x128xf32>
    %146 = vector.extract_strided_slice %144 {offsets = [0, 32], sizes = [16, 32], strides = [1, 1]} : vector<16x128xf32> to vector<16x32xf32>
    %147 = arith.mulf %146, %125 : vector<16x32xf32>
    %148 = vector.extract_strided_slice %144 {offsets = [0, 0], sizes = [16, 32], strides = [1, 1]} : vector<16x128xf32> to vector<16x32xf32>
    %149 = vector.extract_strided_slice %145 {offsets = [0, 64], sizes = [16, 32], strides = [1, 1]} : vector<16x128xf32> to vector<16x32xf32>
    %150 = arith.mulf %148, %149 : vector<16x32xf32>
    %151 = arith.addf %147, %150 : vector<16x32xf32>
    %152 = vector.extract_strided_slice %144 {offsets = [0, 96], sizes = [16, 32], strides = [1, 1]} : vector<16x128xf32> to vector<16x32xf32>
    %153 = math.tanh %151 : vector<16x32xf32>
    %154 = arith.mulf %152, %153 : vector<16x32xf32>
    %155 = tpu.concatenate %154, %154 in 1 : vector<16x32xf32>, vector<16x32xf32> -> vector<16x64xf32>
    %156 = arith.mulf %155, %28 : vector<16x64xf32>
    %c4_i32 = arith.constant 4 : i32
    %157 = vector.broadcast %c4_i32 : i32 to vector<16x1xi32>
    %158 = arith.cmpi eq, %18, %157 : vector<16x1xi32>
    %159 = vector.shape_cast %158 : vector<16x1xi1> to vector<16x1xi1>
    %160 = vector.broadcast %159 : vector<16x1xi1> to vector<16x64xi1>
    %161 = arith.select %160, %156, %135 : vector<16x64xi1>, vector<16x64xf32>
    %162 = vector.extract_strided_slice %13 {offsets = [80, 0], sizes = [16, 128], strides = [1, 1]} : vector<128x128xf32> to vector<16x128xf32>
    %163 = arith.addf %162, %15 : vector<16x128xf32>
    %cst_28 = arith.constant dense<0.000000e+00> : vector<16x128xf32>
    %164 = tpu.matmul %156, %14, %cst_28 {dimension_numbers = #tpu.dot_dimension_numbers<[1], [0], [0], [1], [0, 0, 1, 1], [], []>} : vector<16x64xf32>, vector<64x128xf32>, vector<16x128xf32> -> vector<16x128xf32>
    %165 = arith.addf %163, %164 : vector<16x128xf32>
    %166 = arith.negf %165 : vector<16x128xf32>
    %167 = math.exp %166 : vector<16x128xf32>
    %cst_29 = arith.constant 1.000000e+00 : f32
    %168 = vector.broadcast %cst_29 : f32 to vector<16x128xf32>
    %169 = arith.addf %168, %167 : vector<16x128xf32>
    %170 = arith.divf %168, %169 : vector<16x128xf32>
    %171 = math.tanh %165 : vector<16x128xf32>
    %172 = vector.extract_strided_slice %170 {offsets = [0, 32], sizes = [16, 32], strides = [1, 1]} : vector<16x128xf32> to vector<16x32xf32>
    %173 = arith.mulf %172, %151 : vector<16x32xf32>
    %174 = vector.extract_strided_slice %170 {offsets = [0, 0], sizes = [16, 32], strides = [1, 1]} : vector<16x128xf32> to vector<16x32xf32>
    %175 = vector.extract_strided_slice %171 {offsets = [0, 64], sizes = [16, 32], strides = [1, 1]} : vector<16x128xf32> to vector<16x32xf32>
    %176 = arith.mulf %174, %175 : vector<16x32xf32>
    %177 = arith.addf %173, %176 : vector<16x32xf32>
    %178 = vector.extract_strided_slice %170 {offsets = [0, 96], sizes = [16, 32], strides = [1, 1]} : vector<16x128xf32> to vector<16x32xf32>
    %179 = math.tanh %177 : vector<16x32xf32>
    %180 = arith.mulf %178, %179 : vector<16x32xf32>
    %181 = tpu.concatenate %180, %180 in 1 : vector<16x32xf32>, vector<16x32xf32> -> vector<16x64xf32>
    %182 = arith.mulf %181, %28 : vector<16x64xf32>
    %c5_i32 = arith.constant 5 : i32
    %183 = vector.broadcast %c5_i32 : i32 to vector<16x1xi32>
    %184 = arith.cmpi eq, %18, %183 : vector<16x1xi32>
    %185 = vector.shape_cast %184 : vector<16x1xi1> to vector<16x1xi1>
    %186 = vector.broadcast %185 : vector<16x1xi1> to vector<16x64xi1>
    %187 = arith.select %186, %182, %161 : vector<16x64xi1>, vector<16x64xf32>
    %188 = vector.extract_strided_slice %13 {offsets = [96, 0], sizes = [16, 128], strides = [1, 1]} : vector<128x128xf32> to vector<16x128xf32>
    %189 = arith.addf %188, %15 : vector<16x128xf32>
    %cst_30 = arith.constant dense<0.000000e+00> : vector<16x128xf32>
    %190 = tpu.matmul %182, %14, %cst_30 {dimension_numbers = #tpu.dot_dimension_numbers<[1], [0], [0], [1], [0, 0, 1, 1], [], []>} : vector<16x64xf32>, vector<64x128xf32>, vector<16x128xf32> -> vector<16x128xf32>
    %191 = arith.addf %189, %190 : vector<16x128xf32>
    %192 = arith.negf %191 : vector<16x128xf32>
    %193 = math.exp %192 : vector<16x128xf32>
    %cst_31 = arith.constant 1.000000e+00 : f32
    %194 = vector.broadcast %cst_31 : f32 to vector<16x128xf32>
    %195 = arith.addf %194, %193 : vector<16x128xf32>
    %196 = arith.divf %194, %195 : vector<16x128xf32>
    %197 = math.tanh %191 : vector<16x128xf32>
    %198 = vector.extract_strided_slice %196 {offsets = [0, 32], sizes = [16, 32], strides = [1, 1]} : vector<16x128xf32> to vector<16x32xf32>
    %199 = arith.mulf %198, %177 : vector<16x32xf32>
    %200 = vector.extract_strided_slice %196 {offsets = [0, 0], sizes = [16, 32], strides = [1, 1]} : vector<16x128xf32> to vector<16x32xf32>
    %201 = vector.extract_strided_slice %197 {offsets = [0, 64], sizes = [16, 32], strides = [1, 1]} : vector<16x128xf32> to vector<16x32xf32>
    %202 = arith.mulf %200, %201 : vector<16x32xf32>
    %203 = arith.addf %199, %202 : vector<16x32xf32>
    %204 = vector.extract_strided_slice %196 {offsets = [0, 96], sizes = [16, 32], strides = [1, 1]} : vector<16x128xf32> to vector<16x32xf32>
    %205 = math.tanh %203 : vector<16x32xf32>
    %206 = arith.mulf %204, %205 : vector<16x32xf32>
    %207 = tpu.concatenate %206, %206 in 1 : vector<16x32xf32>, vector<16x32xf32> -> vector<16x64xf32>
    %208 = arith.mulf %207, %28 : vector<16x64xf32>
    %c6_i32 = arith.constant 6 : i32
    %209 = vector.broadcast %c6_i32 : i32 to vector<16x1xi32>
    %210 = arith.cmpi eq, %18, %209 : vector<16x1xi32>
    %211 = vector.shape_cast %210 : vector<16x1xi1> to vector<16x1xi1>
    %212 = vector.broadcast %211 : vector<16x1xi1> to vector<16x64xi1>
    %213 = arith.select %212, %208, %187 : vector<16x64xi1>, vector<16x64xf32>
    %214 = vector.extract_strided_slice %13 {offsets = [112, 0], sizes = [16, 128], strides = [1, 1]} : vector<128x128xf32> to vector<16x128xf32>
    %215 = arith.addf %214, %15 : vector<16x128xf32>
    %cst_32 = arith.constant dense<0.000000e+00> : vector<16x128xf32>
    %216 = tpu.matmul %208, %14, %cst_32 {dimension_numbers = #tpu.dot_dimension_numbers<[1], [0], [0], [1], [0, 0, 1, 1], [], []>} : vector<16x64xf32>, vector<64x128xf32>, vector<16x128xf32> -> vector<16x128xf32>
    %217 = arith.addf %215, %216 : vector<16x128xf32>
    %218 = arith.negf %217 : vector<16x128xf32>
    %219 = math.exp %218 : vector<16x128xf32>
    %cst_33 = arith.constant 1.000000e+00 : f32
    %220 = vector.broadcast %cst_33 : f32 to vector<16x128xf32>
    %221 = arith.addf %220, %219 : vector<16x128xf32>
    %222 = arith.divf %220, %221 : vector<16x128xf32>
    %223 = math.tanh %217 : vector<16x128xf32>
    %224 = vector.extract_strided_slice %222 {offsets = [0, 32], sizes = [16, 32], strides = [1, 1]} : vector<16x128xf32> to vector<16x32xf32>
    %225 = arith.mulf %224, %203 : vector<16x32xf32>
    %226 = vector.extract_strided_slice %222 {offsets = [0, 0], sizes = [16, 32], strides = [1, 1]} : vector<16x128xf32> to vector<16x32xf32>
    %227 = vector.extract_strided_slice %223 {offsets = [0, 64], sizes = [16, 32], strides = [1, 1]} : vector<16x128xf32> to vector<16x32xf32>
    %228 = arith.mulf %226, %227 : vector<16x32xf32>
    %229 = arith.addf %225, %228 : vector<16x32xf32>
    %230 = vector.extract_strided_slice %222 {offsets = [0, 96], sizes = [16, 32], strides = [1, 1]} : vector<16x128xf32> to vector<16x32xf32>
    %231 = math.tanh %229 : vector<16x32xf32>
    %232 = arith.mulf %230, %231 : vector<16x32xf32>
    %233 = tpu.concatenate %232, %232 in 1 : vector<16x32xf32>, vector<16x32xf32> -> vector<16x64xf32>
    %234 = arith.mulf %233, %28 : vector<16x64xf32>
    %c7_i32 = arith.constant 7 : i32
    %235 = vector.broadcast %c7_i32 : i32 to vector<16x1xi32>
    %236 = arith.cmpi eq, %18, %235 : vector<16x1xi32>
    %237 = vector.shape_cast %236 : vector<16x1xi1> to vector<16x1xi1>
    %238 = vector.broadcast %237 : vector<16x1xi1> to vector<16x64xi1>
    %239 = arith.select %238, %234, %213 : vector<16x64xi1>, vector<16x64xf32>
    %c0_34 = arith.constant 0 : index
    %c0_35 = arith.constant 0 : index
    %240 = vector.load %arg7[%c0_34, %c0_35] : memref<64x32xf32, #tpu.memory_space<vmem>>, vector<64x32xf32>
    %cst_36 = arith.constant dense<0.000000e+00> : vector<16x32xf32>
    %241 = tpu.matmul %239, %240, %cst_36 {dimension_numbers = #tpu.dot_dimension_numbers<[1], [0], [0], [1], [0, 0, 1, 1], [], []>} : vector<16x64xf32>, vector<64x32xf32>, vector<16x32xf32> -> vector<16x32xf32>
    %c0_37 = arith.constant 0 : index
    %c0_38 = arith.constant 0 : index
    %242 = vector.load %arg8[%c0_37, %c0_38] : memref<16x32xf32, #tpu.memory_space<vmem>>, vector<16x32xf32>
    %243 = arith.addf %241, %242 : vector<16x32xf32>
    %244 = vector.extract_strided_slice %243 {offsets = [0, 0], sizes = [8, 32], strides = [1, 1]} : vector<16x32xf32> to vector<8x32xf32>
    %245 = vector.extract_strided_slice %243 {offsets = [8, 0], sizes = [8, 32], strides = [1, 1]} : vector<16x32xf32> to vector<8x32xf32>
    %246 = arith.mulf %244, %244 : vector<8x32xf32>
    %cst_39 = arith.constant dense<0.000000e+00> : vector<8xf32>
    %247 = vector.multi_reduction <add>, %246, %cst_39 [1] : vector<8x32xf32> to vector<8xf32>
    %248 = vector.shape_cast %247 : vector<8xf32> to vector<8x1xf32>
    %cst_40 = arith.constant 9.99999993E-9 : f32
    %cst_41 = arith.constant 9.99999993E-9 : f32
    %249 = arith.mulf %cst_40, %cst_41 : f32
    %250 = vector.broadcast %249 : f32 to vector<8x1xf32>
    %251 = arith.maximumf %248, %250 : vector<8x1xf32>
    %252 = math.rsqrt %251 : vector<8x1xf32>
    %253 = arith.mulf %245, %245 : vector<8x32xf32>
    %cst_42 = arith.constant dense<0.000000e+00> : vector<8xf32>
    %254 = vector.multi_reduction <add>, %253, %cst_42 [1] : vector<8x32xf32> to vector<8xf32>
    %255 = vector.shape_cast %254 : vector<8xf32> to vector<8x1xf32>
    %cst_43 = arith.constant 9.99999993E-9 : f32
    %cst_44 = arith.constant 9.99999993E-9 : f32
    %256 = arith.mulf %cst_43, %cst_44 : f32
    %257 = vector.broadcast %256 : f32 to vector<8x1xf32>
    %258 = arith.maximumf %255, %257 : vector<8x1xf32>
    %259 = math.rsqrt %258 : vector<8x1xf32>
    %260 = vector.broadcast %252 : vector<8x1xf32> to vector<8x32xf32>
    %261 = arith.mulf %244, %260 : vector<8x32xf32>
    %262 = vector.broadcast %259 : vector<8x1xf32> to vector<8x32xf32>
    %263 = arith.mulf %245, %262 : vector<8x32xf32>
    %cst_45 = arith.constant dense<0.000000e+00> : vector<8x8xf32>
    %264 = tpu.matmul %261, %263, %cst_45 {dimension_numbers = #tpu.dot_dimension_numbers<[1], [1], [0], [0], [0, 0, 1, 0], [], []>} : vector<8x32xf32>, vector<8x32xf32>, vector<8x8xf32> -> vector<8x8xf32>
    %c0_46 = arith.constant 0 : index
    %c0_47 = arith.constant 0 : index
    %265 = vector.load %arg9[%c0_46, %c0_47] : memref<8x8xf32, #tpu.memory_space<vmem>>, vector<8x8xf32>
    tpu.vector_store %arg9[%c0_46, %c0_47], %264 {strides = array<i32>} : memref<8x8xf32, #tpu.memory_space<vmem>>, vector<8x8xf32>,
    return
  }
  func.func @transform_0(%arg0: i32) -> (i32, i32) {
    %c0_i32 = arith.constant 0 : i32
    %c0_i32_0 = arith.constant 0 : i32
    %c0_i32_1 = arith.constant 0 : i32
    return %c0_i32, %c0_i32_0 : i32, i32
  }
  func.func @transform_1(%arg0: i32) -> (i32, i32) {
    %c0_i32 = arith.constant 0 : i32
    %c0_i32_0 = arith.constant 0 : i32
    %c0_i32_1 = arith.constant 0 : i32
    return %c0_i32, %c0_i32_0 : i32, i32
  }
  func.func @transform_2(%arg0: i32) -> (i32, i32) {
    %c0_i32 = arith.constant 0 : i32
    %c0_i32_0 = arith.constant 0 : i32
    %c0_i32_1 = arith.constant 0 : i32
    return %c0_i32, %c0_i32_0 : i32, i32
  }
  func.func @transform_3(%arg0: i32) -> (i32, i32) {
    %c0_i32 = arith.constant 0 : i32
    %c0_i32_0 = arith.constant 0 : i32
    %c0_i32_1 = arith.constant 0 : i32
    return %c0_i32, %c0_i32_0 : i32, i32
  }
  func.func @transform_4(%arg0: i32) -> (i32, i32) {
    %c0_i32 = arith.constant 0 : i32
    %c0_i32_0 = arith.constant 0 : i32
    %c0_i32_1 = arith.constant 0 : i32
    return %c0_i32, %c0_i32_0 : i32, i32
  }
  func.func @transform_5(%arg0: i32) -> (i32, i32) {
    %c0_i32 = arith.constant 0 : i32
    %c0_i32_0 = arith.constant 0 : i32
    %c0_i32_1 = arith.constant 0 : i32
    return %c0_i32, %c0_i32_0 : i32, i32
  }
  func.func @transform_6(%arg0: i32) -> (i32, i32) {
    %c0_i32 = arith.constant 0 : i32
    %c0_i32_0 = arith.constant 0 : i32
    %c0_i32_1 = arith.constant 0 : i32
    return %c0_i32, %c0_i32_0 : i32, i32
  }
  func.func @transform_7(%arg0: i32) -> (i32, i32) {
    %c0_i32 = arith.constant 0 : i32
    %c0_i32_0 = arith.constant 0 : i32
    %c0_i32_1 = arith.constant 0 : i32
    return %c0_i32, %c0_i32_0 : i32, i32
  }
  func.func @transform_8(%arg0: i32) -> (i32, i32) {
    %c0_i32 = arith.constant 0 : i32
    %c0_i32_0 = arith.constant 0 : i32
    %c0_i32_1 = arith.constant 0 : i32
    return %c0_i32, %c0_i32_0 : i32, i32
  }
}

</mosaic_0001>

<llo_original>
// kernel: lstm_classifier_forward.1
$region0: #{lstm_classifier_forward.1}
  #allocation0 [shape = 'u32[]', space=smem, size = 0x4, offset = 0x4, fixed_abs, tag = 'smem constant byte address 0x4 - core index']
  #allocation1 [shape = 'u32[72,128]{1,0:T(1,128)}', space=vmem, size = 0x9000, scoped, tag = 'internal scratch']
  %s0 = inlined_call_operand.vmem [shape: s32[128,1], index: 0, kind: input, shape index: {}]
  %s1 = inlined_call_operand.vmem [shape: s32[16,1], index: 1, kind: input, shape index: {}]
  %s2 = inlined_call_operand.vmem [shape: f32[56,16], index: 2, kind: input, shape index: {}]
  %s3 = inlined_call_operand.hbm [shape: f32[32,128], index: 3, kind: input, shape index: {}]
  %s4 = inlined_call_operand.vmem [shape: f32[64,128], index: 4, kind: input, shape index: {}]
  %s5 = inlined_call_operand.hbm [shape: f32[16,128], index: 5, kind: input, shape index: {}]
  %s6 = inlined_call_operand.vmem [shape: f32[64,32], index: 6, kind: input, shape index: {}]
  %s7 = inlined_call_operand.hbm [shape: f32[16,32], index: 7, kind: input, shape index: {}]
  %s8 = inlined_call_operand.hbm [shape: f32[8,8], index: 8, kind: output, shape index: {}]
  %s9 = sld [smem:[#allocation0]]
  $region54: #{lstm_classifier_forward.1} parent=0
    _
  %s11 = ssub.s32 1, %s9
  %s12 = scalar_select 0, %s11, %s9
  $region1: #{lstm_classifier_forward.1} parent=0
    #allocation2 [shape = 'u8[16384]{0}', space=vmem, size = 0x4000, scoped, tag = 'input window, operand 3, single buffered']
    #allocation3 [shape = 's32[1]{0}', space=sflag, size = 0x4, scoped, tag = 'scoped memory for lstm_classifier_forward.1']
    #allocation4 [shape = 's32[1]{0}', space=sflag, size = 0x4, scoped, tag = 'scoped memory for lstm_classifier_forward.1']
    #allocation5 [shape = 'u8[8192]{0}', space=vmem, size = 0x2000, scoped, tag = 'input window, operand 5, single buffered']
    #allocation6 [shape = 's32[1]{0}', space=sflag, size = 0x4, scoped, tag = 'scoped memory for lstm_classifier_forward.1']
    #allocation7 [shape = 'u8[8192]{0}', space=vmem, size = 0x2000, scoped, tag = 'input window, operand 7, single buffered']
    #allocation8 [shape = 'u8[4096]{0}', space=vmem, size = 0x1000, scoped, tag = 'output window, operand 0, single buffered']
    %13 = vsyncpa [#allocation3], 0
    %14 = vsyncpa [#allocation6], 0
    %15 = vsyncpa [#allocation4], 0
    // Predicated region
    $region2: #{lstm_classifier_forward.1} parent=1 // pred_check
      _
    $region3: #{lstm_classifier_forward.1} parent=1 // pred_check_branch
      %17 = sbr.rel (0) target = $region5
    $region4: #{lstm_classifier_forward.1} parent=1 // pred_region
      _
    $region5: #{lstm_classifier_forward.1} parent=1 // pred_fallthru
      _
    // Predicated region
    $region6: #{lstm_classifier_forward.1} parent=1 // pred_check
      _
    $region7: #{lstm_classifier_forward.1} parent=1 // pred_check_branch
      %19 = sbr.rel (0) target = $region9
    $region8: #{lstm_classifier_forward.1} parent=1 // pred_region
      _
    $region9: #{lstm_classifier_forward.1} parent=1 // pred_fallthru
      _
    // Predicated region
    $region10: #{lstm_classifier_forward.1} parent=1 // pred_check
      _
    $region11: #{lstm_classifier_forward.1} parent=1 // pred_check_branch
      %21 = sbr.rel (0) target = $region13
    $region12: #{lstm_classifier_forward.1} parent=1 // pred_region
      _
    $region13: #{lstm_classifier_forward.1} parent=1 // pred_fallthru
      _
    // Predicated region
    $region14: #{lstm_classifier_forward.1} parent=1 // pred_check
      _
    $region15: #{lstm_classifier_forward.1} parent=1 // pred_check_branch
      %23 = sbr.rel (0) target = $region17
    $region16: #{lstm_classifier_forward.1} parent=1 // pred_region
      %25 = vsyncadd [#allocation3], 0
      %s26 = sshll.u32 %s3, 4
      %s27 = int_to_ptr.hbm [resolvable:$true] %s26
      %s28 = sshll.u32 [#allocation2], 4
      %s29 = int_to_ptr.vmem [resolvable:$true] %s28
      %34 = dma.hbm_to_vmem [thread:$0]  %s27, 512, %s29, [#allocation3], 128, 128, 8
    $region17: #{lstm_classifier_forward.1} parent=1 // pred_fallthru
      _
    // Predicated region
    $region18: #{lstm_classifier_forward.1} parent=1 // pred_check
      _
    $region19: #{lstm_classifier_forward.1} parent=1 // pred_check_branch
      %36 = sbr.rel (0) target = $region21
    $region20: #{lstm_classifier_forward.1} parent=1 // pred_region
      _
    $region21: #{lstm_classifier_forward.1} parent=1 // pred_fallthru
      _
    // Predicated region
    $region22: #{lstm_classifier_forward.1} parent=1 // pred_check
      _
    $region23: #{lstm_classifier_forward.1} parent=1 // pred_check_branch
      %38 = sbr.rel (0) target = $region25
    $region24: #{lstm_classifier_forward.1} parent=1 // pred_region
      %40 = vsyncadd [#allocation6], 0
      %s41 = sshll.u32 %s5, 4
      %s42 = int_to_ptr.hbm [resolvable:$true] %s41
      %s43 = sshll.u32 [#allocation5], 4
      %s44 = int_to_ptr.vmem [resolvable:$true] %s43
      %49 = dma.hbm_to_vmem [thread:$0]  %s42, 256, %s44, [#allocation6], 128, 128, 8
    $region25: #{lstm_classifier_forward.1} parent=1 // pred_fallthru
      _
    // Predicated region
    $region26: #{lstm_classifier_forward.1} parent=1 // pred_check
      _
    $region27: #{lstm_classifier_forward.1} parent=1 // pred_check_branch
      %51 = sbr.rel (0) target = $region29
    $region28: #{lstm_classifier_forward.1} parent=1 // pred_region
      _
    $region29: #{lstm_classifier_forward.1} parent=1 // pred_fallthru
      _
    // Predicated region
    $region30: #{lstm_classifier_forward.1} parent=1 // pred_check
      _
    $region31: #{lstm_classifier_forward.1} parent=1 // pred_check_branch
      %53 = sbr.rel (0) target = $region33
    $region32: #{lstm_classifier_forward.1} parent=1 // pred_region
      %55 = vsyncadd [#allocation6], 0
      %s56 = sshll.u32 %s7, 4
      %s57 = int_to_ptr.hbm [resolvable:$true] %s56
      %s58 = sshll.u32 [#allocation7], 4
      %s59 = int_to_ptr.vmem [resolvable:$true] %s58
      %64 = dma.hbm_to_vmem [thread:$0]  %s57, 256, %s59, [#allocation6], 128, 128, 8
    $region33: #{lstm_classifier_forward.1} parent=1 // pred_fallthru
      _
    // Predicated region
    $region34: #{lstm_classifier_forward.1} parent=1 // pred_check
      _
    $region35: #{lstm_classifier_forward.1} parent=1 // pred_check_branch
      %66 = sbr.rel (0) target = $region37
    $region36: #{lstm_classifier_forward.1} parent=1 // pred_region
      %68 = dma.done [#allocation3], 512
    $region37: #{lstm_classifier_forward.1} parent=1 // pred_fallthru
      _
    // Predicated region
    $region38: #{lstm_classifier_forward.1} parent=1 // pred_check
      _
    $region39: #{lstm_classifier_forward.1} parent=1 // pred_check_branch
      %70 = sbr.rel (0) target = $region41
    $region40: #{lstm_classifier_forward.1} parent=1 // pred_region
      %72 = dma.done [#allocation6], 256
    $region41: #{lstm_classifier_forward.1} parent=1 // pred_fallthru
      _
    // Predicated region
    $region42: #{lstm_classifier_forward.1} parent=1 // pred_check
      _
    $region43: #{lstm_classifier_forward.1} parent=1 // pred_check_branch
      %74 = sbr.rel (0) target = $region45
    $region44: #{lstm_classifier_forward.1} parent=1 // pred_region
      %76 = dma.done [#allocation6], 256
    $region45: #{lstm_classifier_forward.1} parent=1 // pred_fallthru
      _
    %v77 = vld [vmem:[%s2] sm:$0xff]
    %v78 = vld [vmem:[%s2 + $0x8] sm:$0xff]
    %v79 = vld [vmem:[%s2 + $0x10] sm:$0xff]
    %v80 = vld [vmem:[%s2 + $0x18] sm:$0xff]
    %v81 = vld [vmem:[%s2 + $0x20] sm:$0xff]
    %v82 = vld [vmem:[%s2 + $0x28] sm:$0xff]
    %v83 = vld [vmem:[%s2 + $0x30] sm:$0xff]
    %v84 = vld [vmem:[#allocation2] sm:$0xff]
    %v85 = vld [vmem:[#allocation2 + $0x8] sm:$0xff]
    %v86 = vld [vmem:[#allocation2 + $0x10] sm:$0xff]
    %v87 = vld [vmem:[#allocation2 + $0x18] sm:$0xff]
    %vm88 = vcmask 130048
    %v90 = vsel %vm88, %v77, 0
    %v93 = vsel %vm88, %v78, 0
    %v96 = vsel %vm88, %v79, 0
    %v99 = vsel %vm88, %v80, 0
    %v102 = vsel %vm88, %v81, 0
    %v105 = vsel %vm88, %v82, 0
    %v108 = vsel %vm88, %v83, 0
    %110 = vmatpush.msra.mxu0 0.0
    %111 = vmatpush.msra.mxu0 0.0
    %112 = vmatpush.msra.mxu0 0.0
    %113 = vmatpush.msra.mxu0 0.0
    %114 = vmatpush.msra.mxu0 0.0
    %115 = vmatpush.msra.mxu0 0.0
    %116 = vmatpush.msra.mxu0 0.0
    %117 = vmatpush.msra.mxu0 0.0
    %118 = vmatpush.msra.mxu0 0.0
    %119 = vmatpush.msra.mxu0 0.0
    %120 = vmatpush.msra.mxu0 0.0
    %121 = vmatpush.msra.mxu0 0.0
    %122 = vmatpush.msra.mxu0 0.0
    %123 = vmatpush.msra.mxu0 0.0
    %124 = vmatpush.msra.mxu0 %v85
    %125 = vmatpush.msra.mxu0 %v84
    %126 = vmatmul.f32.gmra.mxu0 %v90
    %v127 = vpop.f32.mrf.mxu0
    %v128 = vadd.f32 0.0, %v127
    %129 = vmatmul.f32.gmra.mxu0 %v93
    %v130 = vpop.f32.mrf.mxu0
    %v131 = vadd.f32 0.0, %v130
    %132 = vmatmul.f32.gmra.mxu0 %v96
    %v133 = vpop.f32.mrf.mxu0
    %v134 = vadd.f32 0.0, %v133
    %135 = vmatmul.f32.gmra.mxu0 %v99
    %v136 = vpop.f32.mrf.mxu0
    %v137 = vadd.f32 0.0, %v136
    %138 = vmatmul.f32.gmra.mxu0 %v102
    %v139 = vpop.f32.mrf.mxu0
    %v140 = vadd.f32 0.0, %v139
    %141 = vmatmul.f32.gmra.mxu0 %v105
    %v142 = vpop.f32.mrf.mxu0
    %v143 = vadd.f32 0.0, %v142
    %144 = vmatmul.f32.gmra.mxu0 %v108
    %v145 = vpop.f32.mrf.mxu0
    %v146 = vadd.f32 0.0, %v145
    %147 = vdwg.mxu0
    %148 = vmatpush.msra.mxu0 0.0
    %149 = vmatpush.msra.mxu0 0.0
    %150 = vmatpush.msra.mxu0 0.0
    %151 = vmatpush.msra.mxu0 0.0
    %152 = vmatpush.msra.mxu0 0.0
    %153 = vmatpush.msra.mxu0 0.0
    %154 = vmatpush.msra.mxu0 0.0
    %155 = vmatpush.msra.mxu0 0.0
    %156 = vmatpush.msra.mxu0 0.0
    %157 = vmatpush.msra.mxu0 0.0
    %158 = vmatpush.msra.mxu0 0.0
    %159 = vmatpush.msra.mxu0 0.0
    %160 = vmatpush.msra.mxu0 0.0
    %161 = vmatpush.msra.mxu0 0.0
    %162 = vmatpush.msra.mxu0 %v87
    %163 = vmatpush.msra.mxu0 %v86
    %164 = vmatmul.f32.gmra.mxu0 %v90
    %v165 = vpop.f32.mrf.mxu0
    %v166 = vadd.f32 0.0, %v165
    %167 = vmatmul.f32.gmra.mxu0 %v93
    %v168 = vpop.f32.mrf.mxu0
    %v169 = vadd.f32 0.0, %v168
    %170 = vmatmul.f32.gmra.mxu0 %v96
    %v171 = vpop.f32.mrf.mxu0
    %v172 = vadd.f32 0.0, %v171
    %173 = vmatmul.f32.gmra.mxu0 %v99
    %v174 = vpop.f32.mrf.mxu0
    %v175 = vadd.f32 0.0, %v174
    %176 = vmatmul.f32.gmra.mxu0 %v102
    %v177 = vpop.f32.mrf.mxu0
    %v178 = vadd.f32 0.0, %v177
    %179 = vmatmul.f32.gmra.mxu0 %v105
    %v180 = vpop.f32.mrf.mxu0
    %v181 = vadd.f32 0.0, %v180
    %182 = vmatmul.f32.gmra.mxu0 %v108
    %v183 = vpop.f32.mrf.mxu0
    %v184 = vadd.f32 0.0, %v183
    %185 = vdwg.mxu0
    %v186 = vld [vmem:[%s0] sm:$0xff]
    %v187 = vld [vmem:[%s0 + $0x8] sm:$0xff]
    %v188 = vld [vmem:[%s0 + $0x10] sm:$0xff]
    %v189 = vld [vmem:[%s0 + $0x18] sm:$0xff]
    %v190 = vld [vmem:[%s0 + $0x20] sm:$0xff]
    %v191 = vld [vmem:[%s0 + $0x28] sm:$0xff]
    %v192 = vld [vmem:[%s0 + $0x30] sm:$0xff]
    %v193 = vld [vmem:[%s0 + $0x38] sm:$0xff]
    %v194 = vld [vmem:[%s0 + $0x40] sm:$0xff]
    %v195 = vld [vmem:[%s0 + $0x48] sm:$0xff]
    %v196 = vld [vmem:[%s0 + $0x50] sm:$0xff]
    %v197 = vld [vmem:[%s0 + $0x58] sm:$0xff]
    %v198 = vld [vmem:[%s0 + $0x60] sm:$0xff]
    %v199 = vld [vmem:[%s0 + $0x68] sm:$0xff]
    %v200 = vld [vmem:[%s0 + $0x70] sm:$0xff]
    %v201 = vld [vmem:[%s0 + $0x78] sm:$0xff]
    %v202 = vlaneseq
    %v203 = vand.u32 %v202, 127
    %204 = vset.pattern.permute.xlu0 0
    %205 = vperm.xlu0 %204, %v186
    %v206 = vpop.permute.xlu0 %205
    %207 = vset.pattern.permute.xlu0 0
    %208 = vperm.xlu0 %207, %v187
    %v209 = vpop.permute.xlu0 %208
    %210 = vset.pattern.permute.xlu0 0
    %211 = vperm.xlu0 %210, %v188
    %v212 = vpop.permute.xlu0 %211
    %213 = vset.pattern.permute.xlu0 0
    %214 = vperm.xlu0 %213, %v189
    %v215 = vpop.permute.xlu0 %214
    %216 = vset.pattern.permute.xlu0 0
    %217 = vperm.xlu0 %216, %v190
    %v218 = vpop.permute.xlu0 %217
    %219 = vset.pattern.permute.xlu0 0
    %220 = vperm.xlu0 %219, %v191
    %v221 = vpop.permute.xlu0 %220
    %222 = vset.pattern.permute.xlu0 0
    %223 = vperm.xlu0 %222, %v192
    %v224 = vpop.permute.xlu0 %223
    %225 = vset.pattern.permute.xlu0 0
    %226 = vperm.xlu0 %225, %v193
    %v227 = vpop.permute.xlu0 %226
    %228 = vset.pattern.permute.xlu0 0
    %229 = vperm.xlu0 %228, %v194
    %v230 = vpop.permute.xlu0 %229
    %231 = vset.pattern.permute.xlu0 0
    %232 = vperm.xlu0 %231, %v195
    %v233 = vpop.permute.xlu0 %232
    %234 = vset.pattern.permute.xlu0 0
    %235 = vperm.xlu0 %234, %v196
    %v236 = vpop.permute.xlu0 %235
    %237 = vset.pattern.permute.xlu0 0
    %238 = vperm.xlu0 %237, %v197
    %v239 = vpop.permute.xlu0 %238
    %240 = vset.pattern.permute.xlu0 0
    %241 = vperm.xlu0 %240, %v198
    %v242 = vpop.permute.xlu0 %241
    %243 = vset.pattern.permute.xlu0 0
    %244 = vperm.xlu0 %243, %v199
    %v245 = vpop.permute.xlu0 %244
    %246 = vset.pattern.permute.xlu0 0
    %247 = vperm.xlu0 %246, %v200
    %v248 = vpop.permute.xlu0 %247
    %249 = vset.pattern.permute.xlu0 0
    %250 = vperm.xlu0 %249, %v201
    %v251 = vpop.permute.xlu0 %250
    %vm252 = vcmp.eq.s32.totalorder %v206, %v203
    %vm253 = vcmp.eq.s32.totalorder %v209, %v203
    %vm254 = vcmp.eq.s32.totalorder %v212, %v203
    %vm255 = vcmp.eq.s32.totalorder %v215, %v203
    %vm256 = vcmp.eq.s32.totalorder %v218, %v203
    %vm257 = vcmp.eq.s32.totalorder %v221, %v203
    %vm258 = vcmp.eq.s32.totalorder %v224, %v203
    %vm259 = vcmp.eq.s32.totalorder %v227, %v203
    %vm260 = vcmp.eq.s32.totalorder %v230, %v203
    %vm261 = vcmp.eq.s32.totalorder %v233, %v203
    %vm262 = vcmp.eq.s32.totalorder %v236, %v203
    %vm263 = vcmp.eq.s32.totalorder %v239, %v203
    %vm264 = vcmp.eq.s32.totalorder %v242, %v203
    %vm265 = vcmp.eq.s32.totalorder %v245, %v203
    %vm266 = vcmp.eq.s32.totalorder %v248, %v203
    %vm267 = vcmp.eq.s32.totalorder %v251, %v203
    %v268 = vsel %vm252, 1, 0
    %v269 = vsel %vm253, 1, 0
    %v270 = vsel %vm254, 1, 0
    %v271 = vsel %vm255, 1, 0
    %v272 = vsel %vm256, 1, 0
    %v273 = vsel %vm257, 1, 0
    %v274 = vsel %vm258, 1, 0
    %v275 = vsel %vm259, 1, 0
    %v276 = vsel %vm260, 1, 0
    %v277 = vsel %vm261, 1, 0
    %v278 = vsel %vm262, 1, 0
    %v279 = vsel %vm263, 1, 0
    %v280 = vsel %vm264, 1, 0
    %v281 = vsel %vm265, 1, 0
    %v282 = vsel %vm266, 1, 0
    %v283 = vsel %vm267, 1, 0
    %v284 = vcvt.s32.f32 %v268
    %v285 = vcvt.s32.f32 %v269
    %v286 = vcvt.s32.f32 %v270
    %v287 = vcvt.s32.f32 %v271
    %v288 = vcvt.s32.f32 %v272
    %v289 = vcvt.s32.f32 %v273
    %v290 = vcvt.s32.f32 %v274
    %v291 = vcvt.s32.f32 %v275
    %v292 = vcvt.s32.f32 %v276
    %v293 = vcvt.s32.f32 %v277
    %v294 = vcvt.s32.f32 %v278
    %v295 = vcvt.s32.f32 %v279
    %v296 = vcvt.s32.f32 %v280
    %v297 = vcvt.s32.f32 %v281
    %v298 = vcvt.s32.f32 %v282
    %v299 = vcvt.s32.f32 %v283
    %vm300 = vcmask 916480
    %v302 = vsel %vm300, %v284, 0
    %v305 = vsel %vm300, %v285, 0
    %v308 = vsel %vm300, %v286, 0
    %v311 = vsel %vm300, %v287, 0
    %v314 = vsel %vm300, %v288, 0
    %v317 = vsel %vm300, %v289, 0
    %v320 = vsel %vm300, %v290, 0
    %v323 = vsel %vm300, %v291, 0
    %v326 = vsel %vm300, %v292, 0
    %v329 = vsel %vm300, %v293, 0
    %v332 = vsel %vm300, %v294, 0
    %v335 = vsel %vm300, %v295, 0
    %v338 = vsel %vm300, %v296, 0
    %v341 = vsel %vm300, %v297, 0
    %v344 = vsel %vm300, %v298, 0
    %v347 = vsel %vm300, %v299, 0
    %349 = vmatpush.msra.mxu0 0.0
    %350 = vmatpush.msra.mxu0 0.0
    %351 = vmatpush.msra.mxu0 %v184
    %352 = vmatpush.msra.mxu0 %v181
    %353 = vmatpush.msra.mxu0 %v178
    %354 = vmatpush.msra.mxu0 %v175
    %355 = vmatpush.msra.mxu0 %v172
    %356 = vmatpush.msra.mxu0 %v169
    %357 = vmatpush.msra.mxu0 %v166
    %358 = vmatpush.msra.mxu0 %v146
    %359 = vmatpush.msra.mxu0 %v143
    %360 = vmatpush.msra.mxu0 %v140
    %361 = vmatpush.msra.mxu0 %v137
    %362 = vmatpush.msra.mxu0 %v134
    %363 = vmatpush.msra.mxu0 %v131
    %364 = vmatpush.msra.mxu0 %v128
    %365 = vmatmul.f32.gmra.mxu0 %v302
    %v366 = vpop.f32.mrf.mxu0
    %v367 = vadd.f32 0.0, %v366
    %368 = vmatmul.f32.gmra.mxu0 %v305
    %v369 = vpop.f32.mrf.mxu0
    %v370 = vadd.f32 0.0, %v369
    %371 = vmatmul.f32.gmra.mxu0 %v308
    %v372 = vpop.f32.mrf.mxu0
    %v373 = vadd.f32 0.0, %v372
    %374 = vmatmul.f32.gmra.mxu0 %v311
    %v375 = vpop.f32.mrf.mxu0
    %v376 = vadd.f32 0.0, %v375
    %377 = vmatmul.f32.gmra.mxu0 %v314
    %v378 = vpop.f32.mrf.mxu0
    %v379 = vadd.f32 0.0, %v378
    %380 = vmatmul.f32.gmra.mxu0 %v317
    %v381 = vpop.f32.mrf.mxu0
    %v382 = vadd.f32 0.0, %v381
    %383 = vmatmul.f32.gmra.mxu0 %v320
    %v384 = vpop.f32.mrf.mxu0
    %v385 = vadd.f32 0.0, %v384
    %386 = vmatmul.f32.gmra.mxu0 %v323
    %v387 = vpop.f32.mrf.mxu0
    %v388 = vadd.f32 0.0, %v387
    %389 = vmatmul.f32.gmra.mxu0 %v326
    %v390 = vpop.f32.mrf.mxu0
    %v391 = vadd.f32 0.0, %v390
    %392 = vmatmul.f32.gmra.mxu0 %v329
    %v393 = vpop.f32.mrf.mxu0
    %v394 = vadd.f32 0.0, %v393
    %395 = vmatmul.f32.gmra.mxu0 %v332
    %v396 = vpop.f32.mrf.mxu0
    %v397 = vadd.f32 0.0, %v396
    %398 = vmatmul.f32.gmra.mxu0 %v335
    %v399 = vpop.f32.mrf.mxu0
    %v400 = vadd.f32 0.0, %v399
    %401 = vmatmul.f32.gmra.mxu0 %v338
    %v402 = vpop.f32.mrf.mxu0
    %v403 = vadd.f32 0.0, %v402
    %404 = vmatmul.f32.gmra.mxu0 %v341
    %v405 = vpop.f32.mrf.mxu0
    %v406 = vadd.f32 0.0, %v405
    %407 = vmatmul.f32.gmra.mxu0 %v344
    %v408 = vpop.f32.mrf.mxu0
    %v409 = vadd.f32 0.0, %v408
    %410 = vmatmul.f32.gmra.mxu0 %v347
    %v411 = vpop.f32.mrf.mxu0
    %v412 = vadd.f32 0.0, %v411
    %413 = vdwg.mxu0
    %v414 = vld [vmem:[%s4] sm:$0xff]
    %v415 = vld [vmem:[%s4 + $0x8] sm:$0xff]
    %v416 = vld [vmem:[%s4 + $0x10] sm:$0xff]
    %v417 = vld [vmem:[%s4 + $0x18] sm:$0xff]
    %v418 = vld [vmem:[%s4 + $0x20] sm:$0xff]
    %v419 = vld [vmem:[%s4 + $0x28] sm:$0xff]
    %v420 = vld [vmem:[%s4 + $0x30] sm:$0xff]
    %v421 = vld [vmem:[%s4 + $0x38] sm:$0xff]
    %v422 = vld [vmem:[#allocation5] sm:$0xff]
    %v423 = vld [vmem:[#allocation5 + $0x8] sm:$0xff]
    %v424 = vld [vmem:[%s1] sm:$0xff]
    %v425 = vld [vmem:[%s1 + $0x8] sm:$0xff]
    %v426 = vsub.s32 %v424, 1
    %v427 = vsub.s32 %v425, 1
    %v428 = vlaneseq
    %v429 = vshrl.u32 %v428, 7
    %v430 = vadd.s32 %v429, 8
    %vm431 = vcmp.lt.s32.totalorder %v429, 8
    %vm432 = vcmp.lt.s32.totalorder %v430, 8
    %vm433 = vcmp.lt.s32.totalorder %v203, 32
    %vm434 = vmxor %vm431, %vm433
    %vm435 = vmxor %vm432, %vm433
    %vm436 = vmxor %vm434, 1
    %vm437 = vmxor %vm435, 1
    %v438 = vsel %vm436, 1, 0
    %v439 = vsel %vm437, 1, 0
    %v440 = vcvt.s32.f32 %v438
    %v441 = vcvt.s32.f32 %v439
    %v442 = vadd.f32 %v367, %v422
    %v443 = vadd.f32 %v370, %v423
    %vm444 = vcmask 523264
    %v446 = vsel %vm444, 0.0, 0
    %448 = vmatpush.msra.mxu0 0.0
    %449 = vmatpush.msra.mxu0 0.0
    %450 = vmatpush.msra.mxu0 0.0
    %451 = vmatpush.msra.mxu0 0.0
    %452 = vmatpush.msra.mxu0 0.0
    %453 = vmatpush.msra.mxu0 0.0
    %454 = vmatpush.msra.mxu0 0.0
    %455 = vmatpush.msra.mxu0 0.0
    %456 = vmatpush.msra.mxu0 %v421
    %457 = vmatpush.msra.mxu0 %v420
    %458 = vmatpush.msra.mxu0 %v419
    %459 = vmatpush.msra.mxu0 %v418
    %460 = vmatpush.msra.mxu0 %v417
    %461 = vmatpush.msra.mxu0 %v416
    %462 = vmatpush.msra.mxu0 %v415
    %463 = vmatpush.msra.mxu0 %v414
    %464 = vmatmul.f32.gmra.mxu0 %v446
    %v465 = vpop.f32.mrf.mxu0
    %v466 = vadd.f32 0.0, %v465
    %467 = vmatmul.f32.gmra.mxu0 %v446
    %v468 = vpop.f32.mrf.mxu0
    %v469 = vadd.f32 0.0, %v468
    %470 = vdwg.mxu0
    %v471 = vadd.f32 %v442, %v466
    %v472 = vadd.f32 %v443, %v469
    %v473 = vxor.u32 %v471, 2147483648
    %v474 = vxor.u32 %v472, 2147483648
    %v475 = vmul.f32 %v473, 1.442695
    %v476 = vpow.pop %v475
    %v477 = vmul.f32 %v474, 1.442695
    %v478 = vpow.pop %v477
    %v479 = vadd.f32 %v476, 1.0
    %v480 = vadd.f32 %v478, 1.0
    %v481 = vrcp.pop %v479
    %v482 = vmul.f32 %v479, %v481
    %v483 = vsub.f32 1.0, %v482
    %v484 = vmul.f32 %v481, %v483
    %v485 = vadd.f32 %v481, %v484
    %vm486 = vweird.f32 %v479
    %vm487 = vweird.f32 %v481
    %vm488 = vmor %vm486, %vm487
    %v489 = vsel %vm488, %v481, %v485
    %v490 = vand.u32 2147483647, %v479
    %vm491 = vcmp.eq.f32.partialorder %v490, 8.507059e+37
    %v492 = vand.u32 %v479, 2147483648
    %v493 = vor.u32 1.1754944e-38, %v492
    %v494 = vsel %vm491, %v493, %v489
    %v495 = vmul.f32 1.0, %v494
    %v496 = vrcp.pop %v480
    %v497 = vmul.f32 %v480, %v496
    %v498 = vsub.f32 1.0, %v497
    %v499 = vmul.f32 %v496, %v498
    %v500 = vadd.f32 %v496, %v499
    %vm501 = vweird.f32 %v480
    %vm502 = vweird.f32 %v496
    %vm503 = vmor %vm501, %vm502
    %v504 = vsel %vm503, %v496, %v500
    %v505 = vand.u32 2147483647, %v480
    %vm506 = vcmp.eq.f32.partialorder %v505, 8.507059e+37
    %v507 = vand.u32 %v480, 2147483648
    %v508 = vor.u32 1.1754944e-38, %v507
    %v509 = vsel %vm506, %v508, %v504
    %v510 = vmul.f32 1.0, %v509
    %v511 = vtanh.pop %v471
    %v512 = vtanh.pop %v472
    %v513 = vmul.f32 %v495, 0.0
    %v514 = vmul.f32 %v510, 0.0
    %517 = vrot.lane.b32.xlu0 %v511, 64
    %v518 = vpop.permute.xlu0 %517
    %519 = vrot.lane.b32.xlu0 %v512, 64
    %v520 = vpop.permute.xlu0 %519
    %v523 = vmul.f32 %v495, %v518
    %v524 = vmul.f32 %v510, %v520
    %527 = vrot.lane.b32.xlu0 %v523, 32
    %v528 = vpop.permute.xlu0 %527
    %529 = vrot.lane.b32.xlu0 %v524, 32
    %v530 = vpop.permute.xlu0 %529
    %v533 = vadd.f32 %v513, %v528
    %v534 = vadd.f32 %v514, %v530
    %v535 = vtanh.pop %v533
    %v536 = vtanh.pop %v534
    %539 = vrot.lane.b32.xlu0 %v535, 64
    %v540 = vpop.permute.xlu0 %539
    %541 = vrot.lane.b32.xlu0 %v536, 64
    %v542 = vpop.permute.xlu0 %541
    %v545 = vmul.f32 %v495, %v540
    %v546 = vmul.f32 %v510, %v542
    %549 = vrot.lane.b32.xlu0 %v545, 32
    %v550 = vpop.permute.xlu0 %549
    %551 = vrot.lane.b32.xlu0 %v546, 32
    %v552 = vpop.permute.xlu0 %551
    %555 = vrot.lane.b32.xlu0 %v545, 64
    %v556 = vpop.permute.xlu0 %555
    %557 = vrot.lane.b32.xlu0 %v546, 64
    %v558 = vpop.permute.xlu0 %557
    %vm561 = vcmask 261120
    %v562 = vsel %vm561, %v550, %v556
    %v563 = vsel %vm561, %v552, %v558
    %v564 = vmul.f32 %v562, %v440
    %v565 = vmul.f32 %v563, %v441
    %vm566 = vcmp.eq.s32.totalorder %v426, 0
    %vm567 = vcmp.eq.s32.totalorder %v427, 0
    %v568 = vsel %vm566, 1, 0
    %v569 = vsel %vm567, 1, 0
    %570 = vset.pattern.permute.xlu0 0
    %571 = vperm.xlu0 %570, %v568
    %v572 = vpop.permute.xlu0 %571
    %573 = vset.pattern.permute.xlu0 0
    %574 = vperm.xlu0 %573, %v569
    %v575 = vpop.permute.xlu0 %574
    %vm576 = vcmp.eq.s32.totalorder %v572, 1
    %vm577 = vcmp.eq.s32.totalorder %v575, 1
    %v578 = vsel %vm576, %v564, 0.0
    %v579 = vsel %vm577, %v565, 0.0
    %v580 = vadd.f32 %v373, %v422
    %v581 = vadd.f32 %v376, %v423
    %v583 = vsel %vm444, %v564, 0
    %v586 = vsel %vm444, %v565, 0
    %588 = vmatpush.msra.mxu0 0.0
    %589 = vmatpush.msra.mxu0 0.0
    %590 = vmatpush.msra.mxu0 0.0
    %591 = vmatpush.msra.mxu0 0.0
    %592 = vmatpush.msra.mxu0 0.0
    %593 = vmatpush.msra.mxu0 0.0
    %594 = vmatpush.msra.mxu0 0.0
    %595 = vmatpush.msra.mxu0 0.0
    %596 = vmatpush.msra.mxu0 %v421
    %597 = vmatpush.msra.mxu0 %v420
    %598 = vmatpush.msra.mxu0 %v419
    %599 = vmatpush.msra.mxu0 %v418
    %600 = vmatpush.msra.mxu0 %v417
    %601 = vmatpush.msra.mxu0 %v416
    %602 = vmatpush.msra.mxu0 %v415
    %603 = vmatpush.msra.mxu0 %v414
    %604 = vmatmul.f32.gmra.mxu0 %v583
    %v605 = vpop.f32.mrf.mxu0
    %v606 = vadd.f32 0.0, %v605
    %607 = vmatmul.f32.gmra.mxu0 %v586
    %v608 = vpop.f32.mrf.mxu0
    %v609 = vadd.f32 0.0, %v608
    %610 = vdwg.mxu0
    %v611 = vadd.f32 %v580, %v606
    %v612 = vadd.f32 %v581, %v609
    %v613 = vxor.u32 %v611, 2147483648
    %v614 = vxor.u32 %v612, 2147483648
    %v615 = vmul.f32 %v613, 1.442695
    %v616 = vpow.pop %v615
    %v617 = vmul.f32 %v614, 1.442695
    %v618 = vpow.pop %v617
    %v619 = vadd.f32 %v616, 1.0
    %v620 = vadd.f32 %v618, 1.0
    %v621 = vrcp.pop %v619
    %v622 = vmul.f32 %v619, %v621
    %v623 = vsub.f32 1.0, %v622
    %v624 = vmul.f32 %v621, %v623
    %v625 = vadd.f32 %v621, %v624
    %vm626 = vweird.f32 %v619
    %vm627 = vweird.f32 %v621
    %vm628 = vmor %vm626, %vm627
    %v629 = vsel %vm628, %v621, %v625
    %v630 = vand.u32 2147483647, %v619
    %vm631 = vcmp.eq.f32.partialorder %v630, 8.507059e+37
    %v632 = vand.u32 %v619, 2147483648
    %v633 = vor.u32 1.1754944e-38, %v632
    %v634 = vsel %vm631, %v633, %v629
    %v635 = vmul.f32 1.0, %v634
    %v636 = vrcp.pop %v620
    %v637 = vmul.f32 %v620, %v636
    %v638 = vsub.f32 1.0, %v637
    %v639 = vmul.f32 %v636, %v638
    %v640 = vadd.f32 %v636, %v639
    %vm641 = vweird.f32 %v620
    %vm642 = vweird.f32 %v636
    %vm643 = vmor %vm641, %vm642
    %v644 = vsel %vm643, %v636, %v640
    %v645 = vand.u32 2147483647, %v620
    %vm646 = vcmp.eq.f32.partialorder %v645, 8.507059e+37
    %v647 = vand.u32 %v620, 2147483648
    %v648 = vor.u32 1.1754944e-38, %v647
    %v649 = vsel %vm646, %v648, %v644
    %v650 = vmul.f32 1.0, %v649
    %v651 = vtanh.pop %v611
    %v652 = vtanh.pop %v612
    %v653 = vmul.f32 %v635, %v533
    %v654 = vmul.f32 %v650, %v534
    %657 = vrot.lane.b32.xlu0 %v651, 64
    %v658 = vpop.permute.xlu0 %657
    %659 = vrot.lane.b32.xlu0 %v652, 64
    %v660 = vpop.permute.xlu0 %659
    %v663 = vmul.f32 %v635, %v658
    %v664 = vmul.f32 %v650, %v660
    %667 = vrot.lane.b32.xlu0 %v663, 32
    %v668 = vpop.permute.xlu0 %667
    %669 = vrot.lane.b32.xlu0 %v664, 32
    %v670 = vpop.permute.xlu0 %669
    %v673 = vadd.f32 %v653, %v668
    %v674 = vadd.f32 %v654, %v670
    %v675 = vtanh.pop %v673
    %v676 = vtanh.pop %v674
    %679 = vrot.lane.b32.xlu0 %v675, 64
    %v680 = vpop.permute.xlu0 %679
    %681 = vrot.lane.b32.xlu0 %v676, 64
    %v682 = vpop.permute.xlu0 %681
    %v685 = vmul.f32 %v635, %v680
    %v686 = vmul.f32 %v650, %v682
    %689 = vrot.lane.b32.xlu0 %v685, 32
    %v690 = vpop.permute.xlu0 %689
    %691 = vrot.lane.b32.xlu0 %v686, 32
    %v692 = vpop.permute.xlu0 %691
    %695 = vrot.lane.b32.xlu0 %v685, 64
    %v696 = vpop.permute.xlu0 %695
    %697 = vrot.lane.b32.xlu0 %v686, 64
    %v698 = vpop.permute.xlu0 %697
    %v701 = vsel %vm561, %v690, %v696
    %v702 = vsel %vm561, %v692, %v698
    %v703 = vmul.f32 %v701, %v440
    %v704 = vmul.f32 %v702, %v441
    %vm705 = vcmp.eq.s32.totalorder %v426, 1
    %vm706 = vcmp.eq.s32.totalorder %v427, 1
    %v707 = vsel %vm705, 1, 0
    %v708 = vsel %vm706, 1, 0
    %709 = vset.pattern.permute.xlu0 0
    %710 = vperm.xlu0 %709, %v707
    %v711 = vpop.permute.xlu0 %710
    %712 = vset.pattern.permute.xlu0 0
    %713 = vperm.xlu0 %712, %v708
    %v714 = vpop.permute.xlu0 %713
    %vm715 = vcmp.eq.s32.totalorder %v711, 1
    %vm716 = vcmp.eq.s32.totalorder %v714, 1
    %v717 = vsel %vm715, %v703, %v578
    %v718 = vsel %vm716, %v704, %v579
    %v719 = vadd.f32 %v379, %v422
    %v720 = vadd.f32 %v382, %v423
    %v722 = vsel %vm444, %v703, 0
    %v725 = vsel %vm444, %v704, 0
    %727 = vmatpush.msra.mxu0 0.0
    %728 = vmatpush.msra.mxu0 0.0
    %729 = vmatpush.msra.mxu0 0.0
    %730 = vmatpush.msra.mxu0 0.0
    %731 = vmatpush.msra.mxu0 0.0
    %732 = vmatpush.msra.mxu0 0.0
    %733 = vmatpush.msra.mxu0 0.0
    %734 = vmatpush.msra.mxu0 0.0
    %735 = vmatpush.msra.mxu0 %v421
    %736 = vmatpush.msra.mxu0 %v420
    %737 = vmatpush.msra.mxu0 %v419
    %738 = vmatpush.msra.mxu0 %v418
    %739 = vmatpush.msra.mxu0 %v417
    %740 = vmatpush.msra.mxu0 %v416
    %741 = vmatpush.msra.mxu0 %v415
    %742 = vmatpush.msra.mxu0 %v414
    %743 = vmatmul.f32.gmra.mxu0 %v722
    %v744 = vpop.f32.mrf.mxu0
    %v745 = vadd.f32 0.0, %v744
    %746 = vmatmul.f32.gmra.mxu0 %v725
    %v747 = vpop.f32.mrf.mxu0
    %v748 = vadd.f32 0.0, %v747
    %749 = vdwg.mxu0
    %v750 = vadd.f32 %v719, %v745
    %v751 = vadd.f32 %v720, %v748
    %v752 = vxor.u32 %v750, 2147483648
    %v753 = vxor.u32 %v751, 2147483648
    %v754 = vmul.f32 %v752, 1.442695
    %v755 = vpow.pop %v754
    %v756 = vmul.f32 %v753, 1.442695
    %v757 = vpow.pop %v756
    %v758 = vadd.f32 %v755, 1.0
    %v759 = vadd.f32 %v757, 1.0
    %v760 = vrcp.pop %v758
    %v761 = vmul.f32 %v758, %v760
    %v762 = vsub.f32 1.0, %v761
    %v763 = vmul.f32 %v760, %v762
    %v764 = vadd.f32 %v760, %v763
    %vm765 = vweird.f32 %v758
    %vm766 = vweird.f32 %v760
    %vm767 = vmor %vm765, %vm766
    %v768 = vsel %vm767, %v760, %v764
    %v769 = vand.u32 2147483647, %v758
    %vm770 = vcmp.eq.f32.partialorder %v769, 8.507059e+37
    %v771 = vand.u32 %v758, 2147483648
    %v772 = vor.u32 1.1754944e-38, %v771
    %v773 = vsel %vm770, %v772, %v768
    %v774 = vmul.f32 1.0, %v773
    %v775 = vrcp.pop %v759
    %v776 = vmul.f32 %v759, %v775
    %v777 = vsub.f32 1.0, %v776
    %v778 = vmul.f32 %v775, %v777
    %v779 = vadd.f32 %v775, %v778
    %vm780 = vweird.f32 %v759
    %vm781 = vweird.f32 %v775
    %vm782 = vmor %vm780, %vm781
    %v783 = vsel %vm782, %v775, %v779
    %v784 = vand.u32 2147483647, %v759
    %vm785 = vcmp.eq.f32.partialorder %v784, 8.507059e+37
    %v786 = vand.u32 %v759, 2147483648
    %v787 = vor.u32 1.1754944e-38, %v786
    %v788 = vsel %vm785, %v787, %v783
    %v789 = vmul.f32 1.0, %v788
    %v790 = vtanh.pop %v750
    %v791 = vtanh.pop %v751
    %v792 = vmul.f32 %v774, %v673
    %v793 = vmul.f32 %v789, %v674
    %796 = vrot.lane.b32.xlu0 %v790, 64
    %v797 = vpop.permute.xlu0 %796
    %798 = vrot.lane.b32.xlu0 %v791, 64
    %v799 = vpop.permute.xlu0 %798
    %v802 = vmul.f32 %v774, %v797
    %v803 = vmul.f32 %v789, %v799
    %806 = vrot.lane.b32.xlu0 %v802, 32
    %v807 = vpop.permute.xlu0 %806
    %808 = vrot.lane.b32.xlu0 %v803, 32
    %v809 = vpop.permute.xlu0 %808
    %v812 = vadd.f32 %v792, %v807
    %v813 = vadd.f32 %v793, %v809
    %v814 = vtanh.pop %v812
    %v815 = vtanh.pop %v813
    %818 = vrot.lane.b32.xlu0 %v814, 64
    %v819 = vpop.permute.xlu0 %818
    %820 = vrot.lane.b32.xlu0 %v815, 64
    %v821 = vpop.permute.xlu0 %820
    %v824 = vmul.f32 %v774, %v819
    %v825 = vmul.f32 %v789, %v821
    %828 = vrot.lane.b32.xlu0 %v824, 32
    %v829 = vpop.permute.xlu0 %828
    %830 = vrot.lane.b32.xlu0 %v825, 32
    %v831 = vpop.permute.xlu0 %830
    %834 = vrot.lane.b32.xlu0 %v824, 64
    %v835 = vpop.permute.xlu0 %834
    %836 = vrot.lane.b32.xlu0 %v825, 64
    %v837 = vpop.permute.xlu0 %836
    %v840 = vsel %vm561, %v829, %v835
    %v841 = vsel %vm561, %v831, %v837
    %v842 = vmul.f32 %v840, %v440
    %v843 = vmul.f32 %v841, %v441
    %vm844 = vcmp.eq.s32.totalorder %v426, 2
    %vm845 = vcmp.eq.s32.totalorder %v427, 2
    %v846 = vsel %vm844, 1, 0
    %v847 = vsel %vm845, 1, 0
    %848 = vset.pattern.permute.xlu0 0
    %849 = vperm.xlu0 %848, %v846
    %v850 = vpop.permute.xlu0 %849
    %851 = vset.pattern.permute.xlu0 0
    %852 = vperm.xlu0 %851, %v847
    %v853 = vpop.permute.xlu0 %852
    %vm854 = vcmp.eq.s32.totalorder %v850, 1
    %vm855 = vcmp.eq.s32.totalorder %v853, 1
    %v856 = vsel %vm854, %v842, %v717
    %v857 = vsel %vm855, %v843, %v718
    %v858 = vadd.f32 %v385, %v422
    %v859 = vadd.f32 %v388, %v423
    %v861 = vsel %vm444, %v842, 0
    %v864 = vsel %vm444, %v843, 0
    %866 = vmatpush.msra.mxu0 0.0
    %867 = vmatpush.msra.mxu0 0.0
    %868 = vmatpush.msra.mxu0 0.0
    %869 = vmatpush.msra.mxu0 0.0
    %870 = vmatpush.msra.mxu0 0.0
    %871 = vmatpush.msra.mxu0 0.0
    %872 = vmatpush.msra.mxu0 0.0
    %873 = vmatpush.msra.mxu0 0.0
    %874 = vmatpush.msra.mxu0 %v421
    %875 = vmatpush.msra.mxu0 %v420
    %876 = vmatpush.msra.mxu0 %v419
    %877 = vmatpush.msra.mxu0 %v418
    %878 = vmatpush.msra.mxu0 %v417
    %879 = vmatpush.msra.mxu0 %v416
    %880 = vmatpush.msra.mxu0 %v415
    %881 = vmatpush.msra.mxu0 %v414
    %882 = vmatmul.f32.gmra.mxu0 %v861
    %v883 = vpop.f32.mrf.mxu0
    %v884 = vadd.f32 0.0, %v883
    %885 = vmatmul.f32.gmra.mxu0 %v864
    %v886 = vpop.f32.mrf.mxu0
    %v887 = vadd.f32 0.0, %v886
    %888 = vdwg.mxu0
    %v889 = vadd.f32 %v858, %v884
    %v890 = vadd.f32 %v859, %v887
    %v891 = vxor.u32 %v889, 2147483648
    %v892 = vxor.u32 %v890, 2147483648
    %v893 = vmul.f32 %v891, 1.442695
    %v894 = vpow.pop %v893
    %v895 = vmul.f32 %v892, 1.442695
    %v896 = vpow.pop %v895
    %v897 = vadd.f32 %v894, 1.0
    %v898 = vadd.f32 %v896, 1.0
    %v899 = vrcp.pop %v897
    %v900 = vmul.f32 %v897, %v899
    %v901 = vsub.f32 1.0, %v900
    %v902 = vmul.f32 %v899, %v901
    %v903 = vadd.f32 %v899, %v902
    %vm904 = vweird.f32 %v897
    %vm905 = vweird.f32 %v899
    %vm906 = vmor %vm904, %vm905
    %v907 = vsel %vm906, %v899, %v903
    %v908 = vand.u32 2147483647, %v897
    %vm909 = vcmp.eq.f32.partialorder %v908, 8.507059e+37
    %v910 = vand.u32 %v897, 2147483648
    %v911 = vor.u32 1.1754944e-38, %v910
    %v912 = vsel %vm909, %v911, %v907
    %v913 = vmul.f32 1.0, %v912
    %v914 = vrcp.pop %v898
    %v915 = vmul.f32 %v898, %v914
    %v916 = vsub.f32 1.0, %v915
    %v917 = vmul.f32 %v914, %v916
    %v918 = vadd.f32 %v914, %v917
    %vm919 = vweird.f32 %v898
    %vm920 = vweird.f32 %v914
    %vm921 = vmor %vm919, %vm920
    %v922 = vsel %vm921, %v914, %v918
    %v923 = vand.u32 2147483647, %v898
    %vm924 = vcmp.eq.f32.partialorder %v923, 8.507059e+37
    %v925 = vand.u32 %v898, 2147483648
    %v926 = vor.u32 1.1754944e-38, %v925
    %v927 = vsel %vm924, %v926, %v922
    %v928 = vmul.f32 1.0, %v927
    %v929 = vtanh.pop %v889
    %v930 = vtanh.pop %v890
    %v931 = vmul.f32 %v913, %v812
    %v932 = vmul.f32 %v928, %v813
    %935 = vrot.lane.b32.xlu0 %v929, 64
    %v936 = vpop.permute.xlu0 %935
    %937 = vrot.lane.b32.xlu0 %v930, 64
    %v938 = vpop.permute.xlu0 %937
    %v941 = vmul.f32 %v913, %v936
    %v942 = vmul.f32 %v928, %v938
    %945 = vrot.lane.b32.xlu0 %v941, 32
    %v946 = vpop.permute.xlu0 %945
    %947 = vrot.lane.b32.xlu0 %v942, 32
    %v948 = vpop.permute.xlu0 %947
    %v951 = vadd.f32 %v931, %v946
    %v952 = vadd.f32 %v932, %v948
    %v953 = vtanh.pop %v951
    %v954 = vtanh.pop %v952
    %957 = vrot.lane.b32.xlu0 %v953, 64
    %v958 = vpop.permute.xlu0 %957
    %959 = vrot.lane.b32.xlu0 %v954, 64
    %v960 = vpop.permute.xlu0 %959
    %v963 = vmul.f32 %v913, %v958
    %v964 = vmul.f32 %v928, %v960
    %967 = vrot.lane.b32.xlu0 %v963, 32
    %v968 = vpop.permute.xlu0 %967
    %969 = vrot.lane.b32.xlu0 %v964, 32
    %v970 = vpop.permute.xlu0 %969
    %973 = vrot.lane.b32.xlu0 %v963, 64
    %v974 = vpop.permute.xlu0 %973
    %975 = vrot.lane.b32.xlu0 %v964, 64
    %v976 = vpop.permute.xlu0 %975
    %v979 = vsel %vm561, %v968, %v974
    %v980 = vsel %vm561, %v970, %v976
    %v981 = vmul.f32 %v979, %v440
    %v982 = vmul.f32 %v980, %v441
    %vm983 = vcmp.eq.s32.totalorder %v426, 3
    %vm984 = vcmp.eq.s32.totalorder %v427, 3
    %v985 = vsel %vm983, 1, 0
    %v986 = vsel %vm984, 1, 0
    %987 = vset.pattern.permute.xlu0 0
    %988 = vperm.xlu0 %987, %v985
    %v989 = vpop.permute.xlu0 %988
    %990 = vset.pattern.permute.xlu0 0
    %991 = vperm.xlu0 %990, %v986
    %v992 = vpop.permute.xlu0 %991
    %vm993 = vcmp.eq.s32.totalorder %v989, 1
    %vm994 = vcmp.eq.s32.totalorder %v992, 1
    %v995 = vsel %vm993, %v981, %v856
    %v996 = vsel %vm994, %v982, %v857
    %v997 = vadd.f32 %v391, %v422
    %v998 = vadd.f32 %v394, %v423
    %v1000 = vsel %vm444, %v981, 0
    %v1003 = vsel %vm444, %v982, 0
    %1005 = vmatpush.msra.mxu0 0.0
    %1006 = vmatpush.msra.mxu0 0.0
    %1007 = vmatpush.msra.mxu0 0.0
    %1008 = vmatpush.msra.mxu0 0.0
    %1009 = vmatpush.msra.mxu0 0.0
    %1010 = vmatpush.msra.mxu0 0.0
    %1011 = vmatpush.msra.mxu0 0.0
    %1012 = vmatpush.msra.mxu0 0.0
    %1013 = vmatpush.msra.mxu0 %v421
    %1014 = vmatpush.msra.mxu0 %v420
    %1015 = vmatpush.msra.mxu0 %v419
    %1016 = vmatpush.msra.mxu0 %v418
    %1017 = vmatpush.msra.mxu0 %v417
    %1018 = vmatpush.msra.mxu0 %v416
    %1019 = vmatpush.msra.mxu0 %v415
    %1020 = vmatpush.msra.mxu0 %v414
    %1021 = vmatmul.f32.gmra.mxu0 %v1000
    %v1022 = vpop.f32.mrf.mxu0
    %v1023 = vadd.f32 0.0, %v1022
    %1024 = vmatmul.f32.gmra.mxu0 %v1003
    %v1025 = vpop.f32.mrf.mxu0
    %v1026 = vadd.f32 0.0, %v1025
    %1027 = vdwg.mxu0
    %v1028 = vadd.f32 %v997, %v1023
    %v1029 = vadd.f32 %v998, %v1026
    %v1030 = vxor.u32 %v1028, 2147483648
    %v1031 = vxor.u32 %v1029, 2147483648
    %v1032 = vmul.f32 %v1030, 1.442695
    %v1033 = vpow.pop %v1032
    %v1034 = vmul.f32 %v1031, 1.442695
    %v1035 = vpow.pop %v1034
    %v1036 = vadd.f32 %v1033, 1.0
    %v1037 = vadd.f32 %v1035, 1.0
    %v1038 = vrcp.pop %v1036
    %v1039 = vmul.f32 %v1036, %v1038
    %v1040 = vsub.f32 1.0, %v1039
    %v1041 = vmul.f32 %v1038, %v1040
    %v1042 = vadd.f32 %v1038, %v1041
    %vm1043 = vweird.f32 %v1036
    %vm1044 = vweird.f32 %v1038
    %vm1045 = vmor %vm1043, %vm1044
    %v1046 = vsel %vm1045, %v1038, %v1042
    %v1047 = vand.u32 2147483647, %v1036
    %vm1048 = vcmp.eq.f32.partialorder %v1047, 8.507059e+37
    %v1049 = vand.u32 %v1036, 2147483648
    %v1050 = vor.u32 1.1754944e-38, %v1049
    %v1051 = vsel %vm1048, %v1050, %v1046
    %v1052 = vmul.f32 1.0, %v1051
    %v1053 = vrcp.pop %v1037
    %v1054 = vmul.f32 %v1037, %v1053
    %v1055 = vsub.f32 1.0, %v1054
    %v1056 = vmul.f32 %v1053, %v1055
    %v1057 = vadd.f32 %v1053, %v1056
    %vm1058 = vweird.f32 %v1037
    %vm1059 = vweird.f32 %v1053
    %vm1060 = vmor %vm1058, %vm1059
    %v1061 = vsel %vm1060, %v1053, %v1057
    %v1062 = vand.u32 2147483647, %v1037
    %vm1063 = vcmp.eq.f32.partialorder %v1062, 8.507059e+37
    %v1064 = vand.u32 %v1037, 2147483648
    %v1065 = vor.u32 1.1754944e-38, %v1064
    %v1066 = vsel %vm1063, %v1065, %v1061
    %v1067 = vmul.f32 1.0, %v1066
    %v1068 = vtanh.pop %v1028
    %v1069 = vtanh.pop %v1029
    %v1070 = vmul.f32 %v1052, %v951
    %v1071 = vmul.f32 %v1067, %v952
    %1074 = vrot.lane.b32.xlu0 %v1068, 64
    %v1075 = vpop.permute.xlu0 %1074
    %1076 = vrot.lane.b32.xlu0 %v1069, 64
    %v1077 = vpop.permute.xlu0 %1076
    %v1080 = vmul.f32 %v1052, %v1075
    %v1081 = vmul.f32 %v1067, %v1077
    %1084 = vrot.lane.b32.xlu0 %v1080, 32
    %v1085 = vpop.permute.xlu0 %1084
    %1086 = vrot.lane.b32.xlu0 %v1081, 32
    %v1087 = vpop.permute.xlu0 %1086
    %v1090 = vadd.f32 %v1070, %v1085
    %v1091 = vadd.f32 %v1071, %v1087
    %v1092 = vtanh.pop %v1090
    %v1093 = vtanh.pop %v1091
    %1096 = vrot.lane.b32.xlu0 %v1092, 64
    %v1097 = vpop.permute.xlu0 %1096
    %1098 = vrot.lane.b32.xlu0 %v1093, 64
    %v1099 = vpop.permute.xlu0 %1098
    %v1102 = vmul.f32 %v1052, %v1097
    %v1103 = vmul.f32 %v1067, %v1099
    %1106 = vrot.lane.b32.xlu0 %v1102, 32
    %v1107 = vpop.permute.xlu0 %1106
    %1108 = vrot.lane.b32.xlu0 %v1103, 32
    %v1109 = vpop.permute.xlu0 %1108
    %1112 = vrot.lane.b32.xlu0 %v1102, 64
    %v1113 = vpop.permute.xlu0 %1112
    %1114 = vrot.lane.b32.xlu0 %v1103, 64
    %v1115 = vpop.permute.xlu0 %1114
    %v1118 = vsel %vm561, %v1107, %v1113
    %v1119 = vsel %vm561, %v1109, %v1115
    %v1120 = vmul.f32 %v1118, %v440
    %v1121 = vmul.f32 %v1119, %v441
    %vm1122 = vcmp.eq.s32.totalorder %v426, 4
    %vm1123 = vcmp.eq.s32.totalorder %v427, 4
    %v1124 = vsel %vm1122, 1, 0
    %v1125 = vsel %vm1123, 1, 0
    %1126 = vset.pattern.permute.xlu0 0
    %1127 = vperm.xlu0 %1126, %v1124
    %v1128 = vpop.permute.xlu0 %1127
    %1129 = vset.pattern.permute.xlu0 0
    %1130 = vperm.xlu0 %1129, %v1125
    %v1131 = vpop.permute.xlu0 %1130
    %vm1132 = vcmp.eq.s32.totalorder %v1128, 1
    %vm1133 = vcmp.eq.s32.totalorder %v1131, 1
    %v1134 = vsel %vm1132, %v1120, %v995
    %v1135 = vsel %vm1133, %v1121, %v996
    %v1136 = vadd.f32 %v397, %v422
    %v1137 = vadd.f32 %v400, %v423
    %v1139 = vsel %vm444, %v1120, 0
    %v1142 = vsel %vm444, %v1121, 0
    %1144 = vmatpush.msra.mxu0 0.0
    %1145 = vmatpush.msra.mxu0 0.0
    %1146 = vmatpush.msra.mxu0 0.0
    %1147 = vmatpush.msra.mxu0 0.0
    %1148 = vmatpush.msra.mxu0 0.0
    %1149 = vmatpush.msra.mxu0 0.0
    %1150 = vmatpush.msra.mxu0 0.0
    %1151 = vmatpush.msra.mxu0 0.0
    %1152 = vmatpush.msra.mxu0 %v421
    %1153 = vmatpush.msra.mxu0 %v420
    %1154 = vmatpush.msra.mxu0 %v419
    %1155 = vmatpush.msra.mxu0 %v418
    %1156 = vmatpush.msra.mxu0 %v417
    %1157 = vmatpush.msra.mxu0 %v416
    %1158 = vmatpush.msra.mxu0 %v415
    %1159 = vmatpush.msra.mxu0 %v414
    %1160 = vmatmul.f32.gmra.mxu0 %v1139
    %v1161 = vpop.f32.mrf.mxu0
    %v1162 = vadd.f32 0.0, %v1161
    %1163 = vmatmul.f32.gmra.mxu0 %v1142
    %v1164 = vpop.f32.mrf.mxu0
    %v1165 = vadd.f32 0.0, %v1164
    %1166 = vdwg.mxu0
    %v1167 = vadd.f32 %v1136, %v1162
    %v1168 = vadd.f32 %v1137, %v1165
    %v1169 = vxor.u32 %v1167, 2147483648
    %v1170 = vxor.u32 %v1168, 2147483648
    %v1171 = vmul.f32 %v1169, 1.442695
    %v1172 = vpow.pop %v1171
    %v1173 = vmul.f32 %v1170, 1.442695
    %v1174 = vpow.pop %v1173
    %v1175 = vadd.f32 %v1172, 1.0
    %v1176 = vadd.f32 %v1174, 1.0
    %v1177 = vrcp.pop %v1175
    %v1178 = vmul.f32 %v1175, %v1177
    %v1179 = vsub.f32 1.0, %v1178
    %v1180 = vmul.f32 %v1177, %v1179
    %v1181 = vadd.f32 %v1177, %v1180
    %vm1182 = vweird.f32 %v1175
    %vm1183 = vweird.f32 %v1177
    %vm1184 = vmor %vm1182, %vm1183
    %v1185 = vsel %vm1184, %v1177, %v1181
    %v1186 = vand.u32 2147483647, %v1175
    %vm1187 = vcmp.eq.f32.partialorder %v1186, 8.507059e+37
    %v1188 = vand.u32 %v1175, 2147483648
    %v1189 = vor.u32 1.1754944e-38, %v1188
    %v1190 = vsel %vm1187, %v1189, %v1185
    %v1191 = vmul.f32 1.0, %v1190
    %v1192 = vrcp.pop %v1176
    %v1193 = vmul.f32 %v1176, %v1192
    %v1194 = vsub.f32 1.0, %v1193
    %v1195 = vmul.f32 %v1192, %v1194
    %v1196 = vadd.f32 %v1192, %v1195
    %vm1197 = vweird.f32 %v1176
    %vm1198 = vweird.f32 %v1192
    %vm1199 = vmor %vm1197, %vm1198
    %v1200 = vsel %vm1199, %v1192, %v1196
    %v1201 = vand.u32 2147483647, %v1176
    %vm1202 = vcmp.eq.f32.partialorder %v1201, 8.507059e+37
    %v1203 = vand.u32 %v1176, 2147483648
    %v1204 = vor.u32 1.1754944e-38, %v1203
    %v1205 = vsel %vm1202, %v1204, %v1200
    %v1206 = vmul.f32 1.0, %v1205
    %v1207 = vtanh.pop %v1167
    %v1208 = vtanh.pop %v1168
    %v1209 = vmul.f32 %v1191, %v1090
    %v1210 = vmul.f32 %v1206, %v1091
    %1213 = vrot.lane.b32.xlu0 %v1207, 64
    %v1214 = vpop.permute.xlu0 %1213
    %1215 = vrot.lane.b32.xlu0 %v1208, 64
    %v1216 = vpop.permute.xlu0 %1215
    %v1219 = vmul.f32 %v1191, %v1214
    %v1220 = vmul.f32 %v1206, %v1216
    %1223 = vrot.lane.b32.xlu0 %v1219, 32
    %v1224 = vpop.permute.xlu0 %1223
    %1225 = vrot.lane.b32.xlu0 %v1220, 32
    %v1226 = vpop.permute.xlu0 %1225
    %v1229 = vadd.f32 %v1209, %v1224
    %v1230 = vadd.f32 %v1210, %v1226
    %v1231 = vtanh.pop %v1229
    %v1232 = vtanh.pop %v1230
    %1235 = vrot.lane.b32.xlu0 %v1231, 64
    %v1236 = vpop.permute.xlu0 %1235
    %1237 = vrot.lane.b32.xlu0 %v1232, 64
    %v1238 = vpop.permute.xlu0 %1237
    %v1241 = vmul.f32 %v1191, %v1236
    %v1242 = vmul.f32 %v1206, %v1238
    %1245 = vrot.lane.b32.xlu0 %v1241, 32
    %v1246 = vpop.permute.xlu0 %1245
    %1247 = vrot.lane.b32.xlu0 %v1242, 32
    %v1248 = vpop.permute.xlu0 %1247
    %1251 = vrot.lane.b32.xlu0 %v1241, 64
    %v1252 = vpop.permute.xlu0 %1251
    %1253 = vrot.lane.b32.xlu0 %v1242, 64
    %v1254 = vpop.permute.xlu0 %1253
    %v1257 = vsel %vm561, %v1246, %v1252
    %v1258 = vsel %vm561, %v1248, %v1254
    %v1259 = vmul.f32 %v1257, %v440
    %v1260 = vmul.f32 %v1258, %v441
    %vm1261 = vcmp.eq.s32.totalorder %v426, 5
    %vm1262 = vcmp.eq.s32.totalorder %v427, 5
    %v1263 = vsel %vm1261, 1, 0
    %v1264 = vsel %vm1262, 1, 0
    %1265 = vset.pattern.permute.xlu0 0
    %1266 = vperm.xlu0 %1265, %v1263
    %v1267 = vpop.permute.xlu0 %1266
    %1268 = vset.pattern.permute.xlu0 0
    %1269 = vperm.xlu0 %1268, %v1264
    %v1270 = vpop.permute.xlu0 %1269
    %vm1271 = vcmp.eq.s32.totalorder %v1267, 1
    %vm1272 = vcmp.eq.s32.totalorder %v1270, 1
    %v1273 = vsel %vm1271, %v1259, %v1134
    %v1274 = vsel %vm1272, %v1260, %v1135
    %v1275 = vadd.f32 %v403, %v422
    %v1276 = vadd.f32 %v406, %v423
    %v1278 = vsel %vm444, %v1259, 0
    %v1281 = vsel %vm444, %v1260, 0
    %1283 = vmatpush.msra.mxu0 0.0
    %1284 = vmatpush.msra.mxu0 0.0
    %1285 = vmatpush.msra.mxu0 0.0
    %1286 = vmatpush.msra.mxu0 0.0
    %1287 = vmatpush.msra.mxu0 0.0
    %1288 = vmatpush.msra.mxu0 0.0
    %1289 = vmatpush.msra.mxu0 0.0
    %1290 = vmatpush.msra.mxu0 0.0
    %1291 = vmatpush.msra.mxu0 %v421
    %1292 = vmatpush.msra.mxu0 %v420
    %1293 = vmatpush.msra.mxu0 %v419
    %1294 = vmatpush.msra.mxu0 %v418
    %1295 = vmatpush.msra.mxu0 %v417
    %1296 = vmatpush.msra.mxu0 %v416
    %1297 = vmatpush.msra.mxu0 %v415
    %1298 = vmatpush.msra.mxu0 %v414
    %1299 = vmatmul.f32.gmra.mxu0 %v1278
    %v1300 = vpop.f32.mrf.mxu0
    %v1301 = vadd.f32 0.0, %v1300
    %1302 = vmatmul.f32.gmra.mxu0 %v1281
    %v1303 = vpop.f32.mrf.mxu0
    %v1304 = vadd.f32 0.0, %v1303
    %1305 = vdwg.mxu0
    %v1306 = vadd.f32 %v1275, %v1301
    %v1307 = vadd.f32 %v1276, %v1304
    %v1308 = vxor.u32 %v1306, 2147483648
    %v1309 = vxor.u32 %v1307, 2147483648
    %v1310 = vmul.f32 %v1308, 1.442695
    %v1311 = vpow.pop %v1310
    %v1312 = vmul.f32 %v1309, 1.442695
    %v1313 = vpow.pop %v1312
    %v1314 = vadd.f32 %v1311, 1.0
    %v1315 = vadd.f32 %v1313, 1.0
    %v1316 = vrcp.pop %v1314
    %v1317 = vmul.f32 %v1314, %v1316
    %v1318 = vsub.f32 1.0, %v1317
    %v1319 = vmul.f32 %v1316, %v1318
    %v1320 = vadd.f32 %v1316, %v1319
    %vm1321 = vweird.f32 %v1314
    %vm1322 = vweird.f32 %v1316
    %vm1323 = vmor %vm1321, %vm1322
    %v1324 = vsel %vm1323, %v1316, %v1320
    %v1325 = vand.u32 2147483647, %v1314
    %vm1326 = vcmp.eq.f32.partialorder %v1325, 8.507059e+37
    %v1327 = vand.u32 %v1314, 2147483648
    %v1328 = vor.u32 1.1754944e-38, %v1327
    %v1329 = vsel %vm1326, %v1328, %v1324
    %v1330 = vmul.f32 1.0, %v1329
    %v1331 = vrcp.pop %v1315
    %v1332 = vmul.f32 %v1315, %v1331
    %v1333 = vsub.f32 1.0, %v1332
    %v1334 = vmul.f32 %v1331, %v1333
    %v1335 = vadd.f32 %v1331, %v1334
    %vm1336 = vweird.f32 %v1315
    %vm1337 = vweird.f32 %v1331
    %vm1338 = vmor %vm1336, %vm1337
    %v1339 = vsel %vm1338, %v1331, %v1335
    %v1340 = vand.u32 2147483647, %v1315
    %vm1341 = vcmp.eq.f32.partialorder %v1340, 8.507059e+37
    %v1342 = vand.u32 %v1315, 2147483648
    %v1343 = vor.u32 1.1754944e-38, %v1342
    %v1344 = vsel %vm1341, %v1343, %v1339
    %v1345 = vmul.f32 1.0, %v1344
    %v1346 = vtanh.pop %v1306
    %v1347 = vtanh.pop %v1307
    %v1348 = vmul.f32 %v1330, %v1229
    %v1349 = vmul.f32 %v1345, %v1230
    %1352 = vrot.lane.b32.xlu0 %v1346, 64
    %v1353 = vpop.permute.xlu0 %1352
    %1354 = vrot.lane.b32.xlu0 %v1347, 64
    %v1355 = vpop.permute.xlu0 %1354
    %v1358 = vmul.f32 %v1330, %v1353
    %v1359 = vmul.f32 %v1345, %v1355
    %1362 = vrot.lane.b32.xlu0 %v1358, 32
    %v1363 = vpop.permute.xlu0 %1362
    %1364 = vrot.lane.b32.xlu0 %v1359, 32
    %v1365 = vpop.permute.xlu0 %1364
    %v1368 = vadd.f32 %v1348, %v1363
    %v1369 = vadd.f32 %v1349, %v1365
    %v1370 = vtanh.pop %v1368
    %v1371 = vtanh.pop %v1369
    %1374 = vrot.lane.b32.xlu0 %v1370, 64
    %v1375 = vpop.permute.xlu0 %1374
    %1376 = vrot.lane.b32.xlu0 %v1371, 64
    %v1377 = vpop.permute.xlu0 %1376
    %v1380 = vmul.f32 %v1330, %v1375
    %v1381 = vmul.f32 %v1345, %v1377
    %1384 = vrot.lane.b32.xlu0 %v1380, 32
    %v1385 = vpop.permute.xlu0 %1384
    %1386 = vrot.lane.b32.xlu0 %v1381, 32
    %v1387 = vpop.permute.xlu0 %1386
    %1390 = vrot.lane.b32.xlu0 %v1380, 64
    %v1391 = vpop.permute.xlu0 %1390
    %1392 = vrot.lane.b32.xlu0 %v1381, 64
    %v1393 = vpop.permute.xlu0 %1392
    %v1396 = vsel %vm561, %v1385, %v1391
    %v1397 = vsel %vm561, %v1387, %v1393
    %v1398 = vmul.f32 %v1396, %v440
    %v1399 = vmul.f32 %v1397, %v441
    %vm1400 = vcmp.eq.s32.totalorder %v426, 6
    %vm1401 = vcmp.eq.s32.totalorder %v427, 6
    %v1402 = vsel %vm1400, 1, 0
    %v1403 = vsel %vm1401, 1, 0
    %1404 = vset.pattern.permute.xlu0 0
    %1405 = vperm.xlu0 %1404, %v1402
    %v1406 = vpop.permute.xlu0 %1405
    %1407 = vset.pattern.permute.xlu0 0
    %1408 = vperm.xlu0 %1407, %v1403
    %v1409 = vpop.permute.xlu0 %1408
    %vm1410 = vcmp.eq.s32.totalorder %v1406, 1
    %vm1411 = vcmp.eq.s32.totalorder %v1409, 1
    %v1412 = vsel %vm1410, %v1398, %v1273
    %v1413 = vsel %vm1411, %v1399, %v1274
    %v1414 = vadd.f32 %v409, %v422
    %v1415 = vadd.f32 %v412, %v423
    %v1417 = vsel %vm444, %v1398, 0
    %v1420 = vsel %vm444, %v1399, 0
    %1422 = vmatpush.msra.mxu0 0.0
    %1423 = vmatpush.msra.mxu0 0.0
    %1424 = vmatpush.msra.mxu0 0.0
    %1425 = vmatpush.msra.mxu0 0.0
    %1426 = vmatpush.msra.mxu0 0.0
    %1427 = vmatpush.msra.mxu0 0.0
    %1428 = vmatpush.msra.mxu0 0.0
    %1429 = vmatpush.msra.mxu0 0.0
    %1430 = vmatpush.msra.mxu0 %v421
    %1431 = vmatpush.msra.mxu0 %v420
    %1432 = vmatpush.msra.mxu0 %v419
    %1433 = vmatpush.msra.mxu0 %v418
    %1434 = vmatpush.msra.mxu0 %v417
    %1435 = vmatpush.msra.mxu0 %v416
    %1436 = vmatpush.msra.mxu0 %v415
    %1437 = vmatpush.msra.mxu0 %v414
    %1438 = vmatmul.f32.gmra.mxu0 %v1417
    %v1439 = vpop.f32.mrf.mxu0
    %v1440 = vadd.f32 0.0, %v1439
    %1441 = vmatmul.f32.gmra.mxu0 %v1420
    %v1442 = vpop.f32.mrf.mxu0
    %v1443 = vadd.f32 0.0, %v1442
    %1444 = vdwg.mxu0
    %v1445 = vadd.f32 %v1414, %v1440
    %v1446 = vadd.f32 %v1415, %v1443
    %v1447 = vxor.u32 %v1445, 2147483648
    %v1448 = vxor.u32 %v1446, 2147483648
    %v1449 = vmul.f32 %v1447, 1.442695
    %v1450 = vpow.pop %v1449
    %v1451 = vmul.f32 %v1448, 1.442695
    %v1452 = vpow.pop %v1451
    %v1453 = vadd.f32 %v1450, 1.0
    %v1454 = vadd.f32 %v1452, 1.0
    %v1455 = vrcp.pop %v1453
    %v1456 = vmul.f32 %v1453, %v1455
    %v1457 = vsub.f32 1.0, %v1456
    %v1458 = vmul.f32 %v1455, %v1457
    %v1459 = vadd.f32 %v1455, %v1458
    %vm1460 = vweird.f32 %v1453
    %vm1461 = vweird.f32 %v1455
    %vm1462 = vmor %vm1460, %vm1461
    %v1463 = vsel %vm1462, %v1455, %v1459
    %v1464 = vand.u32 2147483647, %v1453
    %vm1465 = vcmp.eq.f32.partialorder %v1464, 8.507059e+37
    %v1466 = vand.u32 %v1453, 2147483648
    %v1467 = vor.u32 1.1754944e-38, %v1466
    %v1468 = vsel %vm1465, %v1467, %v1463
    %v1469 = vmul.f32 1.0, %v1468
    %v1470 = vrcp.pop %v1454
    %v1471 = vmul.f32 %v1454, %v1470
    %v1472 = vsub.f32 1.0, %v1471
    %v1473 = vmul.f32 %v1470, %v1472
    %v1474 = vadd.f32 %v1470, %v1473
    %vm1475 = vweird.f32 %v1454
    %vm1476 = vweird.f32 %v1470
    %vm1477 = vmor %vm1475, %vm1476
    %v1478 = vsel %vm1477, %v1470, %v1474
    %v1479 = vand.u32 2147483647, %v1454
    %vm1480 = vcmp.eq.f32.partialorder %v1479, 8.507059e+37
    %v1481 = vand.u32 %v1454, 2147483648
    %v1482 = vor.u32 1.1754944e-38, %v1481
    %v1483 = vsel %vm1480, %v1482, %v1478
    %v1484 = vmul.f32 1.0, %v1483
    %v1485 = vtanh.pop %v1445
    %v1486 = vtanh.pop %v1446
    %v1487 = vmul.f32 %v1469, %v1368
    %v1488 = vmul.f32 %v1484, %v1369
    %1491 = vrot.lane.b32.xlu0 %v1485, 64
    %v1492 = vpop.permute.xlu0 %1491
    %1493 = vrot.lane.b32.xlu0 %v1486, 64
    %v1494 = vpop.permute.xlu0 %1493
    %v1497 = vmul.f32 %v1469, %v1492
    %v1498 = vmul.f32 %v1484, %v1494
    %1501 = vrot.lane.b32.xlu0 %v1497, 32
    %v1502 = vpop.permute.xlu0 %1501
    %1503 = vrot.lane.b32.xlu0 %v1498, 32
    %v1504 = vpop.permute.xlu0 %1503
    %v1507 = vadd.f32 %v1487, %v1502
    %v1508 = vadd.f32 %v1488, %v1504
    %v1509 = vtanh.pop %v1507
    %v1510 = vtanh.pop %v1508
    %1513 = vrot.lane.b32.xlu0 %v1509, 64
    %v1514 = vpop.permute.xlu0 %1513
    %1515 = vrot.lane.b32.xlu0 %v1510, 64
    %v1516 = vpop.permute.xlu0 %1515
    %v1519 = vmul.f32 %v1469, %v1514
    %v1520 = vmul.f32 %v1484, %v1516
    %1523 = vrot.lane.b32.xlu0 %v1519, 32
    %v1524 = vpop.permute.xlu0 %1523
    %1525 = vrot.lane.b32.xlu0 %v1520, 32
    %v1526 = vpop.permute.xlu0 %1525
    %1529 = vrot.lane.b32.xlu0 %v1519, 64
    %v1530 = vpop.permute.xlu0 %1529
    %1531 = vrot.lane.b32.xlu0 %v1520, 64
    %v1532 = vpop.permute.xlu0 %1531
    %v1535 = vsel %vm561, %v1524, %v1530
    %v1536 = vsel %vm561, %v1526, %v1532
    %v1537 = vmul.f32 %v1535, %v440
    %v1538 = vmul.f32 %v1536, %v441
    %vm1539 = vcmp.eq.s32.totalorder %v426, 7
    %vm1540 = vcmp.eq.s32.totalorder %v427, 7
    %v1541 = vsel %vm1539, 1, 0
    %v1542 = vsel %vm1540, 1, 0
    %1543 = vset.pattern.permute.xlu0 0
    %1544 = vperm.xlu0 %1543, %v1541
    %v1545 = vpop.permute.xlu0 %1544
    %1546 = vset.pattern.permute.xlu0 0
    %1547 = vperm.xlu0 %1546, %v1542
    %v1548 = vpop.permute.xlu0 %1547
    %vm1549 = vcmp.eq.s32.totalorder %v1545, 1
    %vm1550 = vcmp.eq.s32.totalorder %v1548, 1
    %v1551 = vsel %vm1549, %v1537, %v1412
    %v1552 = vsel %vm1550, %v1538, %v1413
    %v1553 = vld [vmem:[%s6] sm:$0xff]
    %v1554 = vld [vmem:[%s6 + $0x8] sm:$0xff]
    %v1555 = vld [vmem:[%s6 + $0x10] sm:$0xff]
    %v1556 = vld [vmem:[%s6 + $0x18] sm:$0xff]
    %v1557 = vld [vmem:[%s6 + $0x20] sm:$0xff]
    %v1558 = vld [vmem:[%s6 + $0x28] sm:$0xff]
    %v1559 = vld [vmem:[%s6 + $0x30] sm:$0xff]
    %v1560 = vld [vmem:[%s6 + $0x38] sm:$0xff]
    %v1561 = vld [vmem:[#allocation7] sm:$0xff]
    %v1562 = vld [vmem:[#allocation7 + $0x8] sm:$0xff]
    %v1564 = vsel %vm444, %v1551, 0
    %v1567 = vsel %vm444, %v1552, 0
    %1569 = vmatpush.msra.mxu0 0.0
    %1570 = vmatpush.msra.mxu0 0.0
    %1571 = vmatpush.msra.mxu0 0.0
    %1572 = vmatpush.msra.mxu0 0.0
    %1573 = vmatpush.msra.mxu0 0.0
    %1574 = vmatpush.msra.mxu0 0.0
    %1575 = vmatpush.msra.mxu0 0.0
    %1576 = vmatpush.msra.mxu0 0.0
    %1577 = vmatpush.msra.mxu0 %v1560
    %1578 = vmatpush.msra.mxu0 %v1559
    %1579 = vmatpush.msra.mxu0 %v1558
    %1580 = vmatpush.msra.mxu0 %v1557
    %1581 = vmatpush.msra.mxu0 %v1556
    %1582 = vmatpush.msra.mxu0 %v1555
    %1583 = vmatpush.msra.mxu0 %v1554
    %1584 = vmatpush.msra.mxu0 %v1553
    %1585 = vmatmul.f32.gmra.mxu0 %v1564
    %v1586 = vpop.f32.mrf.mxu0
    %v1587 = vadd.f32 %v1561, %v1586
    %1588 = vmatmul.f32.gmra.mxu0 %v1567
    %v1589 = vpop.f32.mrf.mxu0
    %v1590 = vadd.f32 %v1562, %v1589
    %1591 = vdwg.mxu0
    %v1592 = vmul.f32 %v1587, %v1587
    %v1593 = vsel %vm561, %v1592, 0.0
    %1594 = vadd.xlane.f32.xlu0 %v1593
    %v1595 = vpop.xlane.xlu0 %1594
    %v1596 = vmax.f32 %v1595, 1e-16
    %v1597 = vrsqrt.pop %v1596
    %v1598 = vmul.f32 %v1597, %v1596
    %v1599 = vmul.f32 %v1598, %v1597
    %v1600 = vmul.f32 0.5, %v1599
    %v1601 = vsub.f32 1.5, %v1600
    %v1602 = vmul.f32 %v1597, %v1601
    %vm1603 = vweird.f32 %v1596
    %vm1604 = vweird.f32 %v1597
    %vm1605 = vmor %vm1603, %vm1604
    %v1606 = vsel %vm1605, %v1597, %v1602
    %v1607 = vmul.f32 %v1590, %v1590
    %v1608 = vsel %vm561, %v1607, 0.0
    %1609 = vadd.xlane.f32.xlu0 %v1608
    %v1610 = vpop.xlane.xlu0 %1609
    %v1611 = vmax.f32 %v1610, 1e-16
    %v1612 = vrsqrt.pop %v1611
    %v1613 = vmul.f32 %v1612, %v1611
    %v1614 = vmul.f32 %v1613, %v1612
    %v1615 = vmul.f32 0.5, %v1614
    %v1616 = vsub.f32 1.5, %v1615
    %v1617 = vmul.f32 %v1612, %v1616
    %vm1618 = vweird.f32 %v1611
    %vm1619 = vweird.f32 %v1612
    %vm1620 = vmor %vm1618, %vm1619
    %v1621 = vsel %vm1620, %v1612, %v1617
    %v1622 = vmul.f32 %v1587, %v1606
    %v1623 = vmul.f32 %v1590, %v1621
    %v1625 = vsel %vm561, %v1622, 0
    %v1628 = vsel %vm561, %v1623, 0
    %1630 = vmatpush.xpose.msra.mxu0 0.0
    %1631 = vmatpush.xpose.msra.mxu0 0.0
    %1632 = vmatpush.xpose.msra.mxu0 0.0
    %1633 = vmatpush.xpose.msra.mxu0 0.0
    %1634 = vmatpush.xpose.msra.mxu0 0.0
    %1635 = vmatpush.xpose.msra.mxu0 0.0
    %1636 = vmatpush.xpose.msra.mxu0 0.0
    %1637 = vmatpush.xpose.msra.mxu0 0.0
    %1638 = vmatpush.xpose.msra.mxu0 0.0
    %1639 = vmatpush.xpose.msra.mxu0 0.0
    %1640 = vmatpush.xpose.msra.mxu0 0.0
    %1641 = vmatpush.xpose.msra.mxu0 0.0
    %1642 = vmatpush.xpose.msra.mxu0 0.0
    %1643 = vmatpush.xpose.msra.mxu0 0.0
    %1644 = vmatpush.xpose.msra.mxu0 0.0
    %1645 = vmatpush.xpose.msra.mxu0 %v1628
    %1646 = vmatmul.f32.gmra.mxu0 %v1625
    %v1647 = vpop.f32.mrf.mxu0
    %v1648 = vadd.f32 0.0, %v1647
    %1649 = vdwg.mxu0
    %vm1650 = vcmask 64512
    %1651 = vst.msk [vmem:[#allocation8] sm:$0xff] %vm1650, %v1648
    // Predicated region
    $region46: #{lstm_classifier_forward.1} parent=1 // pred_check
      _
    $region47: #{lstm_classifier_forward.1} parent=1 // pred_check_branch
      %1653 = sbr.rel (0) target = $region49
    $region48: #{lstm_classifier_forward.1} parent=1 // pred_region
      %1655 = vsyncadd [#allocation4], 0
      %s1657 = sshll.u32 [#allocation8], 4
      %s1658 = int_to_ptr.vmem [resolvable:$true] %s1657
      %s1659 = sshll.u32 %s8, 4
      %s1660 = int_to_ptr.hbm [resolvable:$true] %s1659
      %1662 = dma.vmem_to_hbm [thread:$0]  %s1658, 128, %s1660, [#allocation4]
    $region49: #{lstm_classifier_forward.1} parent=1 // pred_fallthru
      _
    // Predicated region
    $region50: #{lstm_classifier_forward.1} parent=1 // pred_check
      _
    $region51: #{lstm_classifier_forward.1} parent=1 // pred_check_branch
      %1664 = sbr.rel (0) target = $region53
    $region52: #{lstm_classifier_forward.1} parent=1 // pred_region
      %1666 = dma.done [#allocation4], 128
    $region53: #{lstm_classifier_forward.1} parent=1 // pred_fallthru
      _
    %1667 = vsyncpa [#allocation3], 1
    %1668 = vsyncpa [#allocation6], 1
    %1669 = vsyncpa [#allocation4], 1

</llo_original>
